<compile_context>
chip_gen: v5e
topology: v5e:2x2
jax: 0.10.0
libtpu: 0.0.40
codegen_flags: <defaults>
</compile_context>

<pallas_src>
import functools

import jax
import jax.numpy as jnp
from jax.experimental import pallas as pl
from jax.experimental.pallas import tpu as pltpu


def _round_up(v, m):
    return ((v + m - 1) // m) * m


def _fused_conv_kernel(x_ref, w1_ref, b1_ref, w2_ref, b2_ref, mask_ref, o_ref,
                       mid_ref, cols1_ref, cols2_ref,
                       *, NB, L, Lg, Wp, CinP, CmidP, K1, K2, P1, P2, ORG):
    """Processes NB images (folded along lanes) per grid step.

    x_ref    : (NB, CinP, Lg)        zero-padded input, flat spatial, 128-aligned origin
    w1_ref   : (CmidP, K1*K1*CinP)   conv1 weights, im2col (kh, kw, ci) order, zero-padded
    b1_ref   : (CmidP, 1)
    w2_ref   : (Cout, K2*K2*CmidP)   conv2 weights, im2col order, zero-padded
    b2_ref   : (Cout, 1)
    mask_ref : (1, NB*L)             1.0 on the valid HxW interior of each padded grid
    o_ref    : (NB, Cout, L)         full padded-grid output (wrapper slices interior)
    mid_ref  : (CmidP, NB*Lg)  VMEM  conv1 result grids (zero ring = conv2 padding)
    cols1_ref: (K1*K1*CinP, NB*L)    im2col patches for conv1
    cols2_ref: (K2*K2*CmidP, NB*L)   im2col patches for conv2
    """
    # Zero the intermediate grid ONCE.  Every step rewrites [ORG, ORG+L) per
    # image; the margins outside are only read by conv2 taps of the discarded
    # padding-ring outputs, so a never-zeroed margin (e.g. on the second
    # TensorCore under 'parallel' sharding) cannot corrupt kept outputs.
    @pl.when(pl.program_id(0) == 0)
    def _():
        mid_ref[...] = jnp.zeros_like(mid_ref)

    # ---------------- conv1: im2col -> one lane-dense MXU matmul -----------
    base1 = ORG - (P1 * Wp + P1)
    cov1 = L + (K1 - 1) * (Wp + 1)
    for b in range(NB):
        # Hoisted load: one covering (CinP, cov1) load per image instead of
        # K1*K1 overlapping ref loads; taps are lane-shifted value slices.
        xcov = x_ref[b, :, base1:base1 + cov1]
        for kh in range(K1):
            for kw in range(K1):
                t = kh * K1 + kw
                off = kh * Wp + kw
                # Full, 8-sublane-aligned tile store (CinP is a multiple of 8).
                cols1_ref[t * CinP:(t + 1) * CinP, b * L:(b + 1) * L] = \
                    xcov[:, off:off + L]
    y1 = jnp.dot(w1_ref[...], cols1_ref[...],
                 preferred_element_type=jnp.float32)
    # Bias, then zero the padding ring so it doubles as conv2's zero padding.
    y1 = (y1 + b1_ref[...]) * mask_ref[...]               # (CmidP, NB*L)

    # Stage the conv1 result entirely in VMEM (no HBM round trip).  ORG and
    # Lg are multiples of 128 -> the 400-lane stores start vreg-aligned.
    for b in range(NB):
        mid_ref[:, b * Lg + ORG:b * Lg + ORG + L] = y1[:, b * L:(b + 1) * L]

    # ---------------- conv2: same trick on the VMEM-resident grid ----------
    base2 = ORG - (P2 * Wp + P2)
    cov2 = L + (K2 - 1) * (Wp + 1)
    for b in range(NB):
        mcov = mid_ref[:, b * Lg + base2:b * Lg + base2 + cov2]
        for kh in range(K2):
            for kw in range(K2):
                t = kh * K2 + kw
                off = kh * Wp + kw
                cols2_ref[t * CmidP:(t + 1) * CmidP, b * L:(b + 1) * L] = \
                    mcov[:, off:off + L]
    y2 = jnp.dot(w2_ref[...], cols2_ref[...],
                 preferred_element_type=jnp.float32)
    y2 = y2 + b2_ref[...]                                  # (Cout, NB*L)

    # One lane-dense (Cout, L) store per image of the full padded grid; the
    # wrapper slices out the HxW interior (no masked 16-lane stores here).
    for b in range(NB):
        o_ref[b, :, :] = y2[:, b * L:(b + 1) * L].astype(o_ref.dtype)


def _default_num_grid_steps(N):
    """2 'parallel' steps on multi-TC chips (v4/v5p/v7x), 1 on v5e/v6e."""
    try:
        kind = jax.devices()[0].device_kind.lower()
    except Exception:  # pragma: no cover - defensive
        kind = ""
    single_tc = any(s in kind for s in
                    ("v5 lite", "v5lite", "v5e", "v6 lite", "v6lite", "v6e"))
    if single_tc or N < 2 or N % 2 != 0:
        return 1
    return 2


def transfer_baseline_conv(x_nchw, params, *, num_grid_steps=None):
    """Forward pass matching the PyTorch module (NCHW in, NCHW out)."""
    N, Cin, H, W = x_nchw.shape
    w1, b1 = params["w1"], params["b1"]          # (5,5,Cin,Cmid), (Cmid,)
    w2, b2 = params["w2"], params["b2"]          # (3,3,Cmid,Cout), (Cout,)
    K1, K2 = w1.shape[0], w2.shape[0]
    Cmid, Cout = w1.shape[3], w2.shape[3]
    P1, P2 = (K1 - 1) // 2, (K2 - 1) // 2
    Hp, Wp = H + 2 * P1, W + 2 * P1
    L = Hp * Wp

    # conv2's 'same' padding must fit inside conv1's masked zero ring; the
    # interior tap reads never wrap rows because the horizontal zero-pad
    # width equals P1 (structural to this flattened layout).
    assert P2 <= P1, "conv2 padding must fit inside conv1's zero ring"

    # Lane-aligned flat margins around each image's padded grid.
    ring = P1 * Wp + P1
    ORG = _round_up(max(ring, 128), 128)          # 128-aligned grid origin
    Lg = _round_up(ORG + L + ring, 128)           # per-image flat extent
    assert ORG >= ring and (Lg - ORG - L) >= ring, "margins must cover taps"

    # Sublane-pad channels to 8 so every tap write is a full aligned tile.
    CinP, CmidP = _round_up(Cin, 8), _round_up(Cmid, 8)

    if num_grid_steps is None:
        num_grid_steps = _default_num_grid_steps(N)
    assert N % num_grid_steps == 0
    NB = N // num_grid_steps                      # images folded per step

    # Input: pad channels to CinP, 'same'-pad spatially by P1, flatten space,
    # then add the lane-aligned flat margins.
    x_p = jnp.pad(x_nchw, ((0, 0), (0, CinP - Cin), (P1, P1), (P1, P1)))
    x_flat = x_p.reshape(N, CinP, L).astype(jnp.float32)
    x_flat = jnp.pad(x_flat, ((0, 0), (0, 0), (ORG, Lg - ORG - L)))

    # Weights as (rows, K*K*C) im2col matrices; padded rows/cols are zero so
    # the padded sublanes contribute exactly zero.
    w1_m = jnp.transpose(w1, (3, 0, 1, 2))                       # (Cmid,K,K,Cin)
    w1_m = jnp.pad(w1_m, ((0, CmidP - Cmid), (0, 0), (0, 0), (0, CinP - Cin)))
    w1_m = w1_m.reshape(CmidP, K1 * K1 * CinP).astype(jnp.float32)
    b1_c = jnp.pad(b1, (0, CmidP - Cmid)).reshape(CmidP, 1).astype(jnp.float32)

    w2_m = jnp.transpose(w2, (3, 0, 1, 2))                       # (Cout,K,K,Cmid)
    w2_m = jnp.pad(w2_m, ((0, 0), (0, 0), (0, 0), (0, CmidP - Cmid)))
    w2_m = w2_m.reshape(Cout, K2 * K2 * CmidP).astype(jnp.float32)
    b2_c = b2.reshape(Cout, 1).astype(jnp.float32)

    # Valid-interior mask of the padded grid, tiled over the NB folded images.
    rows = jax.lax.broadcasted_iota(jnp.int32, (Hp, Wp), 0)
    cols = jax.lax.broadcasted_iota(jnp.int32, (Hp, Wp), 1)
    valid = (rows >= P1) & (rows < P1 + H) & (cols >= P1) & (cols < P1 + W)
    mask = jnp.tile(valid.astype(jnp.float32).reshape(1, L), (1, NB))

    kernel = functools.partial(
        _fused_conv_kernel, NB=NB, L=L, Lg=Lg, Wp=Wp, CinP=CinP, CmidP=CmidP,
        K1=K1, K2=K2, P1=P1, P2=P2, ORG=ORG)

    out = pl.pallas_call(
        kernel,
        out_shape=jax.ShapeDtypeStruct((N, Cout, L), x_nchw.dtype),
        grid_spec=pltpu.PrefetchScalarGridSpec(
            num_scalar_prefetch=0,
            grid=(num_grid_steps,),
            in_specs=[
                pl.BlockSpec((NB, CinP, Lg), lambda n: (n, 0, 0)),
                pl.BlockSpec((CmidP, K1 * K1 * CinP), lambda n: (0, 0)),
                pl.BlockSpec((CmidP, 1), lambda n: (0, 0)),
                pl.BlockSpec((Cout, K2 * K2 * CmidP), lambda n: (0, 0)),
                pl.BlockSpec((Cout, 1), lambda n: (0, 0)),
                pl.BlockSpec((1, NB * L), lambda n: (0, 0)),
            ],
            out_specs=pl.BlockSpec((NB, Cout, L), lambda n: (n, 0, 0)),
            scratch_shapes=[
                pltpu.VMEM((CmidP, NB * Lg), jnp.float32),
                pltpu.VMEM((K1 * K1 * CinP, NB * L), jnp.float32),
                pltpu.VMEM((K2 * K2 * CmidP, NB * L), jnp.float32),
            ],
        ),
        compiler_params=pltpu.CompilerParams(
            dimension_semantics=("parallel",)),
    )(x_flat, w1_m, b1_c, w2_m, b2_c, mask)

    # (N, Cout, Hp*Wp) -> drop the padding ring -> contiguous NCHW.
    return out.reshape(N, Cout, Hp, Wp)[:, :, P1:P1 + H, P1:P1 + W]


def init_params(key, in_channels, out_channels, dtype=jnp.float32):
    k1, k2, k3, k4 = jax.random.split(key, 4)
    # conv1: in -> in, 5x5 ; conv2: in -> out, 3x3.  Stored HWIO (K,K,Cin,Cout).
    s1 = 1.0 / (in_channels * 5 * 5) ** 0.5
    s2 = 1.0 / (in_channels * 3 * 3) ** 0.5
    return {
        "w1": (jax.random.uniform(k1, (5, 5, in_channels, in_channels), dtype,
                                  minval=-1.0, maxval=1.0) * s1),
        "b1": (jax.random.uniform(k2, (in_channels,), dtype,
                                  minval=-1.0, maxval=1.0) * s1),
        "w2": (jax.random.uniform(k3, (3, 3, in_channels, out_channels), dtype,
                                  minval=-1.0, maxval=1.0) * s2),
        "b2": (jax.random.uniform(k4, (out_channels,), dtype,
                                  minval=-1.0, maxval=1.0) * s2),
    }


def _reference(x_nchw, params):
    """Pure-JAX reference (lax conv) for a correctness check."""
    def conv(x, w, b, pad):
        y = jax.lax.conv_general_dilated(
            x, w, window_strides=(1, 1), padding=[(pad, pad), (pad, pad)],
            dimension_numbers=("NCHW", "HWIO", "NCHW"))
        return y + b[None, :, None, None]
    y = conv(x_nchw, params["w1"], params["b1"], 2)
    y = conv(y, params["w2"], params["b2"], 1)
    return y


if __name__ == "__main__":
    key = jax.random.PRNGKey(0)
    kx, kp = jax.random.split(key)

    N, Cin, Cout, H, W = 2, 4, 8, 16, 16
    x = jax.random.normal(kx, (N, Cin, H, W), jnp.float32)
    params = init_params(kp, Cin, Cout)

    out = jax.block_until_ready(transfer_baseline_conv(x, params))
    ref = jax.block_until_ready(_reference(x, params))

    assert out.shape == (N, Cout, H, W), out.shape
    assert jnp.allclose(out, ref, rtol=1e-4, atol=1e-4), (
        "mismatch vs reference, max abs err = "
        + str(float(jnp.max(jnp.abs(out - ref)))))

    print("KERNEL_OK")
</pallas_src>

<mosaic_0001>
module attributes {stable_mosaic.version = 11 : i64} {
  func.func @_fused_conv_kernel(%arg0: i32, %arg1: memref<1x8x640xf32, #tpu.memory_space<vmem>>, %arg2: memref<8x200xf32, #tpu.memory_space<vmem>>, %arg3: memref<8x1xf32, #tpu.memory_space<vmem>>, %arg4: memref<8x72xf32, #tpu.memory_space<vmem>>, %arg5: memref<8x1xf32, #tpu.memory_space<vmem>>, %arg6: memref<1x400xf32, #tpu.memory_space<vmem>>, %arg7: memref<1x8x400xf32, #tpu.memory_space<vmem>>, %arg8: memref<8x640xf32, #tpu.memory_space<vmem>>, %arg9: memref<200x400xf32, #tpu.memory_space<vmem>>, %arg10: memref<72x400xf32, #tpu.memory_space<vmem>>) attributes {dimension_semantics = [#tpu.dimension_semantics<parallel>], iteration_bounds = array<i64: 2>, scalar_prefetch = 0 : i64, scratch_operands = 3 : i64, tpu.core_type = #tpu.core_type<tc>, window_params = [{transform_indices = @transform_0, window_bounds = array<i64: 1, 8, 640>}, {pipeline_mode = #tpu.pipeline_mode<synchronous>, transform_indices = @transform_1, window_bounds = array<i64: 8, 200>}, {pipeline_mode = #tpu.pipeline_mode<synchronous>, transform_indices = @transform_2, window_bounds = array<i64: 8, 1>}, {pipeline_mode = #tpu.pipeline_mode<synchronous>, transform_indices = @transform_3, window_bounds = array<i64: 8, 72>}, {pipeline_mode = #tpu.pipeline_mode<synchronous>, transform_indices = @transform_4, window_bounds = array<i64: 8, 1>}, {pipeline_mode = #tpu.pipeline_mode<synchronous>, transform_indices = @transform_5, window_bounds = array<i64: 1, 400>}, {transform_indices = @transform_6, window_bounds = array<i64: 1, 8, 400>}]} {
    %c0_i32 = arith.constant 0 : i32
    %0 = arith.cmpi eq, %arg0, %c0_i32 : i32
    %1 = arith.extui %0 : i1 to i32
    %c0_i32_0 = arith.constant 0 : i32
    %2 = arith.cmpi ne, %1, %c0_i32_0 : i32
    scf.if %2 {
      %cst_67 = arith.constant 0.000000e+00 : f32
      %93 = vector.broadcast %cst_67 : f32 to vector<8x640xf32>
      %c0_68 = arith.constant 0 : index
      %c0_69 = arith.constant 0 : index
      %94 = vector.load %arg8[%c0_68, %c0_69] : memref<8x640xf32, #tpu.memory_space<vmem>>, vector<8x640xf32>
      tpu.vector_store %arg8[%c0_68, %c0_69], %93 {strides = array<i32>} : memref<8x640xf32, #tpu.memory_space<vmem>>, vector<8x640xf32>,
    } else {
    }
    %c0 = arith.constant 0 : index
    %c0_1 = arith.constant 0 : index
    %c86 = arith.constant 86 : index
    %3 = vector.load %arg1[%c0, %c0_1, %c86] : memref<1x8x640xf32, #tpu.memory_space<vmem>>, vector<1x8x484xf32>
    %4 = vector.shape_cast %3 : vector<1x8x484xf32> to vector<8x484xf32>
    %5 = vector.extract_strided_slice %4 {offsets = [0, 0], sizes = [8, 400], strides = [1, 1]} : vector<8x484xf32> to vector<8x400xf32>
    %c0_2 = arith.constant 0 : index
    %c0_3 = arith.constant 0 : index
    %6 = vector.load %arg9[%c0_2, %c0_3] : memref<200x400xf32, #tpu.memory_space<vmem>>, vector<8x400xf32>
    tpu.vector_store %arg9[%c0_2, %c0_3], %5 {strides = array<i32>} : memref<200x400xf32, #tpu.memory_space<vmem>>, vector<8x400xf32>,
    %7 = vector.extract_strided_slice %4 {offsets = [0, 1], sizes = [8, 400], strides = [1, 1]} : vector<8x484xf32> to vector<8x400xf32>
    %c8 = arith.constant 8 : index
    %c0_4 = arith.constant 0 : index
    %8 = vector.load %arg9[%c8, %c0_4] : memref<200x400xf32, #tpu.memory_space<vmem>>, vector<8x400xf32>
    tpu.vector_store %arg9[%c8, %c0_4], %7 {strides = array<i32>} : memref<200x400xf32, #tpu.memory_space<vmem>>, vector<8x400xf32>,
    %9 = vector.extract_strided_slice %4 {offsets = [0, 2], sizes = [8, 400], strides = [1, 1]} : vector<8x484xf32> to vector<8x400xf32>
    %c16 = arith.constant 16 : index
    %c0_5 = arith.constant 0 : index
    %10 = vector.load %arg9[%c16, %c0_5] : memref<200x400xf32, #tpu.memory_space<vmem>>, vector<8x400xf32>
    tpu.vector_store %arg9[%c16, %c0_5], %9 {strides = array<i32>} : memref<200x400xf32, #tpu.memory_space<vmem>>, vector<8x400xf32>,
    %11 = vector.extract_strided_slice %4 {offsets = [0, 3], sizes = [8, 400], strides = [1, 1]} : vector<8x484xf32> to vector<8x400xf32>
    %c24 = arith.constant 24 : index
    %c0_6 = arith.constant 0 : index
    %12 = vector.load %arg9[%c24, %c0_6] : memref<200x400xf32, #tpu.memory_space<vmem>>, vector<8x400xf32>
    tpu.vector_store %arg9[%c24, %c0_6], %11 {strides = array<i32>} : memref<200x400xf32, #tpu.memory_space<vmem>>, vector<8x400xf32>,
    %13 = vector.extract_strided_slice %4 {offsets = [0, 4], sizes = [8, 400], strides = [1, 1]} : vector<8x484xf32> to vector<8x400xf32>
    %c32 = arith.constant 32 : index
    %c0_7 = arith.constant 0 : index
    %14 = vector.load %arg9[%c32, %c0_7] : memref<200x400xf32, #tpu.memory_space<vmem>>, vector<8x400xf32>
    tpu.vector_store %arg9[%c32, %c0_7], %13 {strides = array<i32>} : memref<200x400xf32, #tpu.memory_space<vmem>>, vector<8x400xf32>,
    %15 = vector.extract_strided_slice %4 {offsets = [0, 20], sizes = [8, 400], strides = [1, 1]} : vector<8x484xf32> to vector<8x400xf32>
    %c40 = arith.constant 40 : index
    %c0_8 = arith.constant 0 : index
    %16 = vector.load %arg9[%c40, %c0_8] : memref<200x400xf32, #tpu.memory_space<vmem>>, vector<8x400xf32>
    tpu.vector_store %arg9[%c40, %c0_8], %15 {strides = array<i32>} : memref<200x400xf32, #tpu.memory_space<vmem>>, vector<8x400xf32>,
    %17 = vector.extract_strided_slice %4 {offsets = [0, 21], sizes = [8, 400], strides = [1, 1]} : vector<8x484xf32> to vector<8x400xf32>
    %c48 = arith.constant 48 : index
    %c0_9 = arith.constant 0 : index
    %18 = vector.load %arg9[%c48, %c0_9] : memref<200x400xf32, #tpu.memory_space<vmem>>, vector<8x400xf32>
    tpu.vector_store %arg9[%c48, %c0_9], %17 {strides = array<i32>} : memref<200x400xf32, #tpu.memory_space<vmem>>, vector<8x400xf32>,
    %19 = vector.extract_strided_slice %4 {offsets = [0, 22], sizes = [8, 400], strides = [1, 1]} : vector<8x484xf32> to vector<8x400xf32>
    %c56 = arith.constant 56 : index
    %c0_10 = arith.constant 0 : index
    %20 = vector.load %arg9[%c56, %c0_10] : memref<200x400xf32, #tpu.memory_space<vmem>>, vector<8x400xf32>
    tpu.vector_store %arg9[%c56, %c0_10], %19 {strides = array<i32>} : memref<200x400xf32, #tpu.memory_space<vmem>>, vector<8x400xf32>,
    %21 = vector.extract_strided_slice %4 {offsets = [0, 23], sizes = [8, 400], strides = [1, 1]} : vector<8x484xf32> to vector<8x400xf32>
    %c64 = arith.constant 64 : index
    %c0_11 = arith.constant 0 : index
    %22 = vector.load %arg9[%c64, %c0_11] : memref<200x400xf32, #tpu.memory_space<vmem>>, vector<8x400xf32>
    tpu.vector_store %arg9[%c64, %c0_11], %21 {strides = array<i32>} : memref<200x400xf32, #tpu.memory_space<vmem>>, vector<8x400xf32>,
    %23 = vector.extract_strided_slice %4 {offsets = [0, 24], sizes = [8, 400], strides = [1, 1]} : vector<8x484xf32> to vector<8x400xf32>
    %c72 = arith.constant 72 : index
    %c0_12 = arith.constant 0 : index
    %24 = vector.load %arg9[%c72, %c0_12] : memref<200x400xf32, #tpu.memory_space<vmem>>, vector<8x400xf32>
    tpu.vector_store %arg9[%c72, %c0_12], %23 {strides = array<i32>} : memref<200x400xf32, #tpu.memory_space<vmem>>, vector<8x400xf32>,
    %25 = vector.extract_strided_slice %4 {offsets = [0, 40], sizes = [8, 400], strides = [1, 1]} : vector<8x484xf32> to vector<8x400xf32>
    %c80 = arith.constant 80 : index
    %c0_13 = arith.constant 0 : index
    %26 = vector.load %arg9[%c80, %c0_13] : memref<200x400xf32, #tpu.memory_space<vmem>>, vector<8x400xf32>
    tpu.vector_store %arg9[%c80, %c0_13], %25 {strides = array<i32>} : memref<200x400xf32, #tpu.memory_space<vmem>>, vector<8x400xf32>,
    %27 = vector.extract_strided_slice %4 {offsets = [0, 41], sizes = [8, 400], strides = [1, 1]} : vector<8x484xf32> to vector<8x400xf32>
    %c88 = arith.constant 88 : index
    %c0_14 = arith.constant 0 : index
    %28 = vector.load %arg9[%c88, %c0_14] : memref<200x400xf32, #tpu.memory_space<vmem>>, vector<8x400xf32>
    tpu.vector_store %arg9[%c88, %c0_14], %27 {strides = array<i32>} : memref<200x400xf32, #tpu.memory_space<vmem>>, vector<8x400xf32>,
    %29 = vector.extract_strided_slice %4 {offsets = [0, 42], sizes = [8, 400], strides = [1, 1]} : vector<8x484xf32> to vector<8x400xf32>
    %c96 = arith.constant 96 : index
    %c0_15 = arith.constant 0 : index
    %30 = vector.load %arg9[%c96, %c0_15] : memref<200x400xf32, #tpu.memory_space<vmem>>, vector<8x400xf32>
    tpu.vector_store %arg9[%c96, %c0_15], %29 {strides = array<i32>} : memref<200x400xf32, #tpu.memory_space<vmem>>, vector<8x400xf32>,
    %31 = vector.extract_strided_slice %4 {offsets = [0, 43], sizes = [8, 400], strides = [1, 1]} : vector<8x484xf32> to vector<8x400xf32>
    %c104 = arith.constant 104 : index
    %c0_16 = arith.constant 0 : index
    %32 = vector.load %arg9[%c104, %c0_16] : memref<200x400xf32, #tpu.memory_space<vmem>>, vector<8x400xf32>
    tpu.vector_store %arg9[%c104, %c0_16], %31 {strides = array<i32>} : memref<200x400xf32, #tpu.memory_space<vmem>>, vector<8x400xf32>,
    %33 = vector.extract_strided_slice %4 {offsets = [0, 44], sizes = [8, 400], strides = [1, 1]} : vector<8x484xf32> to vector<8x400xf32>
    %c112 = arith.constant 112 : index
    %c0_17 = arith.constant 0 : index
    %34 = vector.load %arg9[%c112, %c0_17] : memref<200x400xf32, #tpu.memory_space<vmem>>, vector<8x400xf32>
    tpu.vector_store %arg9[%c112, %c0_17], %33 {strides = array<i32>} : memref<200x400xf32, #tpu.memory_space<vmem>>, vector<8x400xf32>,
    %35 = vector.extract_strided_slice %4 {offsets = [0, 60], sizes = [8, 400], strides = [1, 1]} : vector<8x484xf32> to vector<8x400xf32>
    %c120 = arith.constant 120 : index
    %c0_18 = arith.constant 0 : index
    %36 = vector.load %arg9[%c120, %c0_18] : memref<200x400xf32, #tpu.memory_space<vmem>>, vector<8x400xf32>
    tpu.vector_store %arg9[%c120, %c0_18], %35 {strides = array<i32>} : memref<200x400xf32, #tpu.memory_space<vmem>>, vector<8x400xf32>,
    %37 = vector.extract_strided_slice %4 {offsets = [0, 61], sizes = [8, 400], strides = [1, 1]} : vector<8x484xf32> to vector<8x400xf32>
    %c128 = arith.constant 128 : index
    %c0_19 = arith.constant 0 : index
    %38 = vector.load %arg9[%c128, %c0_19] : memref<200x400xf32, #tpu.memory_space<vmem>>, vector<8x400xf32>
    tpu.vector_store %arg9[%c128, %c0_19], %37 {strides = array<i32>} : memref<200x400xf32, #tpu.memory_space<vmem>>, vector<8x400xf32>,
    %39 = vector.extract_strided_slice %4 {offsets = [0, 62], sizes = [8, 400], strides = [1, 1]} : vector<8x484xf32> to vector<8x400xf32>
    %c136 = arith.constant 136 : index
    %c0_20 = arith.constant 0 : index
    %40 = vector.load %arg9[%c136, %c0_20] : memref<200x400xf32, #tpu.memory_space<vmem>>, vector<8x400xf32>
    tpu.vector_store %arg9[%c136, %c0_20], %39 {strides = array<i32>} : memref<200x400xf32, #tpu.memory_space<vmem>>, vector<8x400xf32>,
    %41 = vector.extract_strided_slice %4 {offsets = [0, 63], sizes = [8, 400], strides = [1, 1]} : vector<8x484xf32> to vector<8x400xf32>
    %c144 = arith.constant 144 : index
    %c0_21 = arith.constant 0 : index
    %42 = vector.load %arg9[%c144, %c0_21] : memref<200x400xf32, #tpu.memory_space<vmem>>, vector<8x400xf32>
    tpu.vector_store %arg9[%c144, %c0_21], %41 {strides = array<i32>} : memref<200x400xf32, #tpu.memory_space<vmem>>, vector<8x400xf32>,
    %43 = vector.extract_strided_slice %4 {offsets = [0, 64], sizes = [8, 400], strides = [1, 1]} : vector<8x484xf32> to vector<8x400xf32>
    %c152 = arith.constant 152 : index
    %c0_22 = arith.constant 0 : index
    %44 = vector.load %arg9[%c152, %c0_22] : memref<200x400xf32, #tpu.memory_space<vmem>>, vector<8x400xf32>
    tpu.vector_store %arg9[%c152, %c0_22], %43 {strides = array<i32>} : memref<200x400xf32, #tpu.memory_space<vmem>>, vector<8x400xf32>,
    %45 = vector.extract_strided_slice %4 {offsets = [0, 80], sizes = [8, 400], strides = [1, 1]} : vector<8x484xf32> to vector<8x400xf32>
    %c160 = arith.constant 160 : index
    %c0_23 = arith.constant 0 : index
    %46 = vector.load %arg9[%c160, %c0_23] : memref<200x400xf32, #tpu.memory_space<vmem>>, vector<8x400xf32>
    tpu.vector_store %arg9[%c160, %c0_23], %45 {strides = array<i32>} : memref<200x400xf32, #tpu.memory_space<vmem>>, vector<8x400xf32>,
    %47 = vector.extract_strided_slice %4 {offsets = [0, 81], sizes = [8, 400], strides = [1, 1]} : vector<8x484xf32> to vector<8x400xf32>
    %c168 = arith.constant 168 : index
    %c0_24 = arith.constant 0 : index
    %48 = vector.load %arg9[%c168, %c0_24] : memref<200x400xf32, #tpu.memory_space<vmem>>, vector<8x400xf32>
    tpu.vector_store %arg9[%c168, %c0_24], %47 {strides = array<i32>} : memref<200x400xf32, #tpu.memory_space<vmem>>, vector<8x400xf32>,
    %49 = vector.extract_strided_slice %4 {offsets = [0, 82], sizes = [8, 400], strides = [1, 1]} : vector<8x484xf32> to vector<8x400xf32>
    %c176 = arith.constant 176 : index
    %c0_25 = arith.constant 0 : index
    %50 = vector.load %arg9[%c176, %c0_25] : memref<200x400xf32, #tpu.memory_space<vmem>>, vector<8x400xf32>
    tpu.vector_store %arg9[%c176, %c0_25], %49 {strides = array<i32>} : memref<200x400xf32, #tpu.memory_space<vmem>>, vector<8x400xf32>,
    %51 = vector.extract_strided_slice %4 {offsets = [0, 83], sizes = [8, 400], strides = [1, 1]} : vector<8x484xf32> to vector<8x400xf32>
    %c184 = arith.constant 184 : index
    %c0_26 = arith.constant 0 : index
    %52 = vector.load %arg9[%c184, %c0_26] : memref<200x400xf32, #tpu.memory_space<vmem>>, vector<8x400xf32>
    tpu.vector_store %arg9[%c184, %c0_26], %51 {strides = array<i32>} : memref<200x400xf32, #tpu.memory_space<vmem>>, vector<8x400xf32>,
    %53 = vector.extract_strided_slice %4 {offsets = [0, 84], sizes = [8, 400], strides = [1, 1]} : vector<8x484xf32> to vector<8x400xf32>
    %c192 = arith.constant 192 : index
    %c0_27 = arith.constant 0 : index
    %54 = vector.load %arg9[%c192, %c0_27] : memref<200x400xf32, #tpu.memory_space<vmem>>, vector<8x400xf32>
    tpu.vector_store %arg9[%c192, %c0_27], %53 {strides = array<i32>} : memref<200x400xf32, #tpu.memory_space<vmem>>, vector<8x400xf32>,
    %c0_28 = arith.constant 0 : index
    %c0_29 = arith.constant 0 : index
    %55 = vector.load %arg2[%c0_28, %c0_29] : memref<8x200xf32, #tpu.memory_space<vmem>>, vector<8x200xf32>
    %c0_30 = arith.constant 0 : index
    %c0_31 = arith.constant 0 : index
    %56 = vector.load %arg9[%c0_30, %c0_31] : memref<200x400xf32, #tpu.memory_space<vmem>>, vector<200x400xf32>
    %cst = arith.constant dense<0.000000e+00> : vector<8x400xf32>
    %57 = tpu.matmul %55, %56, %cst {dimension_numbers = #tpu.dot_dimension_numbers<[1], [0], [0], [1], [0, 0, 1, 1], [], []>} : vector<8x200xf32>, vector<200x400xf32>, vector<8x400xf32> -> vector<8x400xf32>
    %c0_32 = arith.constant 0 : index
    %c0_33 = arith.constant 0 : index
    %58 = vector.load %arg3[%c0_32, %c0_33] : memref<8x1xf32, #tpu.memory_space<vmem>>, vector<8x1xf32>
    %59 = vector.broadcast %58 : vector<8x1xf32> to vector<8x400xf32>
    %60 = arith.addf %57, %59 : vector<8x400xf32>
    %c0_34 = arith.constant 0 : index
    %c0_35 = arith.constant 0 : index
    %61 = vector.load %arg6[%c0_34, %c0_35] : memref<1x400xf32, #tpu.memory_space<vmem>>, vector<1x400xf32>
    %62 = vector.broadcast %61 : vector<1x400xf32> to vector<8x400xf32>
    %63 = arith.mulf %60, %62 : vector<8x400xf32>
    %c0_36 = arith.constant 0 : index
    %c128_37 = arith.constant 128 : index
    %64 = vector.load %arg8[%c0_36, %c128_37] : memref<8x640xf32, #tpu.memory_space<vmem>>, vector<8x400xf32>
    tpu.vector_store %arg8[%c0_36, %c128_37], %63 {strides = array<i32>} : memref<8x640xf32, #tpu.memory_space<vmem>>, vector<8x400xf32>,
    %c0_38 = arith.constant 0 : index
    %c107 = arith.constant 107 : index
    %65 = vector.load %arg8[%c0_38, %c107] : memref<8x640xf32, #tpu.memory_space<vmem>>, vector<8x442xf32>
    %66 = vector.extract_strided_slice %65 {offsets = [0, 0], sizes = [8, 400], strides = [1, 1]} : vector<8x442xf32> to vector<8x400xf32>
    %c0_39 = arith.constant 0 : index
    %c0_40 = arith.constant 0 : index
    %67 = vector.load %arg10[%c0_39, %c0_40] : memref<72x400xf32, #tpu.memory_space<vmem>>, vector<8x400xf32>
    tpu.vector_store %arg10[%c0_39, %c0_40], %66 {strides = array<i32>} : memref<72x400xf32, #tpu.memory_space<vmem>>, vector<8x400xf32>,
    %68 = vector.extract_strided_slice %65 {offsets = [0, 1], sizes = [8, 400], strides = [1, 1]} : vector<8x442xf32> to vector<8x400xf32>
    %c8_41 = arith.constant 8 : index
    %c0_42 = arith.constant 0 : index
    %69 = vector.load %arg10[%c8_41, %c0_42] : memref<72x400xf32, #tpu.memory_space<vmem>>, vector<8x400xf32>
    tpu.vector_store %arg10[%c8_41, %c0_42], %68 {strides = array<i32>} : memref<72x400xf32, #tpu.memory_space<vmem>>, vector<8x400xf32>,
    %70 = vector.extract_strided_slice %65 {offsets = [0, 2], sizes = [8, 400], strides = [1, 1]} : vector<8x442xf32> to vector<8x400xf32>
    %c16_43 = arith.constant 16 : index
    %c0_44 = arith.constant 0 : index
    %71 = vector.load %arg10[%c16_43, %c0_44] : memref<72x400xf32, #tpu.memory_space<vmem>>, vector<8x400xf32>
    tpu.vector_store %arg10[%c16_43, %c0_44], %70 {strides = array<i32>} : memref<72x400xf32, #tpu.memory_space<vmem>>, vector<8x400xf32>,
    %72 = vector.extract_strided_slice %65 {offsets = [0, 20], sizes = [8, 400], strides = [1, 1]} : vector<8x442xf32> to vector<8x400xf32>
    %c24_45 = arith.constant 24 : index
    %c0_46 = arith.constant 0 : index
    %73 = vector.load %arg10[%c24_45, %c0_46] : memref<72x400xf32, #tpu.memory_space<vmem>>, vector<8x400xf32>
    tpu.vector_store %arg10[%c24_45, %c0_46], %72 {strides = array<i32>} : memref<72x400xf32, #tpu.memory_space<vmem>>, vector<8x400xf32>,
    %74 = vector.extract_strided_slice %65 {offsets = [0, 21], sizes = [8, 400], strides = [1, 1]} : vector<8x442xf32> to vector<8x400xf32>
    %c32_47 = arith.constant 32 : index
    %c0_48 = arith.constant 0 : index
    %75 = vector.load %arg10[%c32_47, %c0_48] : memref<72x400xf32, #tpu.memory_space<vmem>>, vector<8x400xf32>
    tpu.vector_store %arg10[%c32_47, %c0_48], %74 {strides = array<i32>} : memref<72x400xf32, #tpu.memory_space<vmem>>, vector<8x400xf32>,
    %76 = vector.extract_strided_slice %65 {offsets = [0, 22], sizes = [8, 400], strides = [1, 1]} : vector<8x442xf32> to vector<8x400xf32>
    %c40_49 = arith.constant 40 : index
    %c0_50 = arith.constant 0 : index
    %77 = vector.load %arg10[%c40_49, %c0_50] : memref<72x400xf32, #tpu.memory_space<vmem>>, vector<8x400xf32>
    tpu.vector_store %arg10[%c40_49, %c0_50], %76 {strides = array<i32>} : memref<72x400xf32, #tpu.memory_space<vmem>>, vector<8x400xf32>,
    %78 = vector.extract_strided_slice %65 {offsets = [0, 40], sizes = [8, 400], strides = [1, 1]} : vector<8x442xf32> to vector<8x400xf32>
    %c48_51 = arith.constant 48 : index
    %c0_52 = arith.constant 0 : index
    %79 = vector.load %arg10[%c48_51, %c0_52] : memref<72x400xf32, #tpu.memory_space<vmem>>, vector<8x400xf32>
    tpu.vector_store %arg10[%c48_51, %c0_52], %78 {strides = array<i32>} : memref<72x400xf32, #tpu.memory_space<vmem>>, vector<8x400xf32>,
    %80 = vector.extract_strided_slice %65 {offsets = [0, 41], sizes = [8, 400], strides = [1, 1]} : vector<8x442xf32> to vector<8x400xf32>
    %c56_53 = arith.constant 56 : index
    %c0_54 = arith.constant 0 : index
    %81 = vector.load %arg10[%c56_53, %c0_54] : memref<72x400xf32, #tpu.memory_space<vmem>>, vector<8x400xf32>
    tpu.vector_store %arg10[%c56_53, %c0_54], %80 {strides = array<i32>} : memref<72x400xf32, #tpu.memory_space<vmem>>, vector<8x400xf32>,
    %82 = vector.extract_strided_slice %65 {offsets = [0, 42], sizes = [8, 400], strides = [1, 1]} : vector<8x442xf32> to vector<8x400xf32>
    %c64_55 = arith.constant 64 : index
    %c0_56 = arith.constant 0 : index
    %83 = vector.load %arg10[%c64_55, %c0_56] : memref<72x400xf32, #tpu.memory_space<vmem>>, vector<8x400xf32>
    tpu.vector_store %arg10[%c64_55, %c0_56], %82 {strides = array<i32>} : memref<72x400xf32, #tpu.memory_space<vmem>>, vector<8x400xf32>,
    %c0_57 = arith.constant 0 : index
    %c0_58 = arith.constant 0 : index
    %84 = vector.load %arg4[%c0_57, %c0_58] : memref<8x72xf32, #tpu.memory_space<vmem>>, vector<8x72xf32>
    %c0_59 = arith.constant 0 : index
    %c0_60 = arith.constant 0 : index
    %85 = vector.load %arg10[%c0_59, %c0_60] : memref<72x400xf32, #tpu.memory_space<vmem>>, vector<72x400xf32>
    %cst_61 = arith.constant dense<0.000000e+00> : vector<8x400xf32>
    %86 = tpu.matmul %84, %85, %cst_61 {dimension_numbers = #tpu.dot_dimension_numbers<[1], [0], [0], [1], [0, 0, 1, 1], [], []>} : vector<8x72xf32>, vector<72x400xf32>, vector<8x400xf32> -> vector<8x400xf32>
    %c0_62 = arith.constant 0 : index
    %c0_63 = arith.constant 0 : index
    %87 = vector.load %arg5[%c0_62, %c0_63] : memref<8x1xf32, #tpu.memory_space<vmem>>, vector<8x1xf32>
    %88 = vector.broadcast %87 : vector<8x1xf32> to vector<8x400xf32>
    %89 = arith.addf %86, %88 : vector<8x400xf32>
    %c0_64 = arith.constant 0 : index
    %c0_65 = arith.constant 0 : index
    %c0_66 = arith.constant 0 : index
    %90 = vector.load %arg7[%c0_64, %c0_65, %c0_66] : memref<1x8x400xf32, #tpu.memory_space<vmem>>, vector<1x8x400xf32>
    %91 = vector.shape_cast %90 : vector<1x8x400xf32> to vector<8x400xf32>
    %92 = vector.shape_cast %89 : vector<8x400xf32> to vector<1x8x400xf32>
    tpu.vector_store %arg7[%c0_64, %c0_65, %c0_66], %92 {strides = array<i32>} : memref<1x8x400xf32, #tpu.memory_space<vmem>>, vector<1x8x400xf32>,
    return
  }
  func.func @transform_0(%arg0: i32) -> (i32, i32, i32) {
    %c0_i32 = arith.constant 0 : i32
    %c0_i32_0 = arith.constant 0 : i32
    %c0_i32_1 = arith.constant 0 : i32
    return %arg0, %c0_i32, %c0_i32_0 : i32, i32, i32
  }
  func.func @transform_1(%arg0: i32) -> (i32, i32) {
    %c0_i32 = arith.constant 0 : i32
    %c0_i32_0 = arith.constant 0 : i32
    %c0_i32_1 = arith.constant 0 : i32
    return %c0_i32, %c0_i32_0 : i32, i32
  }
  func.func @transform_2(%arg0: i32) -> (i32, i32) {
    %c0_i32 = arith.constant 0 : i32
    %c0_i32_0 = arith.constant 0 : i32
    %c0_i32_1 = arith.constant 0 : i32
    return %c0_i32, %c0_i32_0 : i32, i32
  }
  func.func @transform_3(%arg0: i32) -> (i32, i32) {
    %c0_i32 = arith.constant 0 : i32
    %c0_i32_0 = arith.constant 0 : i32
    %c0_i32_1 = arith.constant 0 : i32
    return %c0_i32, %c0_i32_0 : i32, i32
  }
  func.func @transform_4(%arg0: i32) -> (i32, i32) {
    %c0_i32 = arith.constant 0 : i32
    %c0_i32_0 = arith.constant 0 : i32
    %c0_i32_1 = arith.constant 0 : i32
    return %c0_i32, %c0_i32_0 : i32, i32
  }
  func.func @transform_5(%arg0: i32) -> (i32, i32) {
    %c0_i32 = arith.constant 0 : i32
    %c0_i32_0 = arith.constant 0 : i32
    %c0_i32_1 = arith.constant 0 : i32
    return %c0_i32, %c0_i32_0 : i32, i32
  }
  func.func @transform_6(%arg0: i32) -> (i32, i32, i32) {
    %c0_i32 = arith.constant 0 : i32
    %c0_i32_0 = arith.constant 0 : i32
    %c0_i32_1 = arith.constant 0 : i32
    return %arg0, %c0_i32, %c0_i32_0 : i32, i32, i32
  }
}

</mosaic_0001>

<llo_original>
// kernel: tpu_custom_call.1
$region0: #{tpu_custom_call.1}
  #allocation0 [shape = 'u32[]', space=smem, size = 0x4, offset = 0x4, fixed_abs, tag = 'smem constant byte address 0x4 - core index']
  #allocation1 [shape = 'u32[72,128]{1,0:T(1,128)}', space=vmem, size = 0x9000, scoped, tag = 'internal scratch']
  #allocation2 [shape = 'f32[8,640]{1,0:T(8,128)}', space=vmem, size = 0x5000, scoped, tag = 'scratch operand']
  #allocation3 [shape = 'f32[200,400]{1,0:T(8,128)}', space=vmem, size = 0x64000, scoped, tag = 'scratch operand']
  #allocation4 [shape = 'f32[72,400]{1,0:T(8,128)}', space=vmem, size = 0x24000, scoped, tag = 'scratch operand']
  %s0 = inlined_call_operand.hbm [shape: f32[2,8,640], index: 0, kind: input, shape index: {}]
  %s1 = inlined_call_operand.vmem [shape: f32[8,200], index: 1, kind: input, shape index: {}]
  %s2 = inlined_call_operand.vmem [shape: f32[8,1], index: 2, kind: input, shape index: {}]
  %s3 = inlined_call_operand.hbm [shape: f32[8,72], index: 3, kind: input, shape index: {}]
  %s4 = inlined_call_operand.vmem [shape: f32[8,1], index: 4, kind: input, shape index: {}]
  %s5 = inlined_call_operand.hbm [shape: f32[1,400], index: 5, kind: input, shape index: {}]
  %s6 = inlined_call_operand.hbm [shape: f32[2,8,400], index: 6, kind: output, shape index: {}]
  %s7 = sld [smem:[#allocation0]]
  $region73: #{tpu_custom_call.1} parent=0
    _
  %s9 = ssub.s32 1, %s7
  %s10 = scalar_select 0, %s9, %s7
  $region1: #{tpu_custom_call.1} parent=0
    #allocation5 [shape = 'u8[40960]{0}', space=vmem, size = 0xa000, scoped, tag = 'input window, operand 0']
    #allocation6 [shape = 's32[2]{0}', space=sflag, size = 0x8, scoped, tag = 'scoped memory for tpu_custom_call.1']
    #allocation7 [shape = 's32[2]{0}', space=sflag, size = 0x8, scoped, tag = 'scoped memory for tpu_custom_call.1']
    #allocation8 [shape = 'u8[4096]{0}', space=vmem, size = 0x1000, scoped, tag = 'input window, operand 3, single buffered']
    #allocation9 [shape = 's32[1]{0}', space=sflag, size = 0x4, scoped, tag = 'scoped memory for tpu_custom_call.1']
    #allocation10 [shape = 'u8[2048]{0}', space=vmem, size = 0x800, scoped, tag = 'input window, operand 5, single buffered']
    #allocation11 [shape = 'u8[32768]{0}', space=vmem, size = 0x8000, scoped, tag = 'output window, operand 0']
    %11 = vsyncpa [#allocation6], 0
    %s12 = scalar_lea.sflag [#allocation6], 1
    %13 = vsyncpa %s12, 0
    %14 = vsyncpa [#allocation9], 0
    %15 = vsyncpa [#allocation7], 0
    %s16 = scalar_lea.sflag [#allocation7], 1
    %17 = vsyncpa %s16, 0
    loop: start=0, step=1, limit=4
    $region2: #{tpu_custom_call.1} parent=1 // loop_pre_header
      _
    $region3: #{tpu_custom_call.1} parent=1 // loop_header
      %s19 = sphi 0, %s23
      %p20 = scmp.ge.s32.totalorder %s19, 4
      %s29 = sphi 0, %s31
      %s32 = sphi 0, %s29
      %s33 = sphi 0, %s32
      %s49 = sphi 0, %s33
      %s53 = sphi 0, %s53
      %s55 = sphi 0, %s53
      %s56 = sphi 0, %s55
      %s70 = sphi 0, %s56
      %s74 = sphi 0, %s74
      %s76 = sphi 0, %s74
      %s77 = sphi 0, %s76
      %s91 = sphi 0, %s77
      %s95 = sphi 0, %s95
      %s97 = sphi 0, %s95
      %s98 = sphi 0, %s97
      %s112 = sphi 0, %s98
      %s116 = sphi 0, %s116
      %s118 = sphi 0, %s116
      %s119 = sphi 0, %s118
      %s133 = sphi 0, %s119
      %s137 = sphi 0, %s137
      %s139 = sphi 0, %s137
      %s140 = sphi 0, %s139
      %s154 = sphi 0, %s140
      %s160 = sphi 0, %s162
      %s163 = sphi 0, %s160
      %s164 = sphi 0, %s163
      %s180 = sphi 0, %s164
    $region4: #{tpu_custom_call.1} parent=1 // loop_header_branch
      %22 = sbr.rel (%p20) target = $region8
    $region5: #{tpu_custom_call.1} parent=1 // loop_body
      %s24 = ssub.s32 %s19, 1
      %s25 = ssub.s32 %s19, 2
      %s26 = sadd.s32 %s19, 1
      %s27 = ssub.s32 %s19, %s26
      %p28 = scmp.eq.s32.totalorder %s27, 0
      %s30 = sadd.s32 %s29, 1
      %s31 = scalar_select %p28, %s29, %s30
      %p34 = pneg %p28
      %p35 = scmp.eq.s32.totalorder %s19, 1
      %p36 = por %p34, %p35
      %p37 = scmp.ne.s32.totalorder %s29, %s32
      %p38 = scmp.eq.s32.totalorder %s19, 0
      %p39 = por %p37, %p38
      %p40 = scmp.ne.s32.totalorder %s29, %s32
      %p41 = scmp.eq.s32.totalorder %s24, 1
      %p42 = por %p40, %p41
      %p43 = scmp.ne.s32.totalorder %s32, %s33
      %p44 = scmp.eq.s32.totalorder %s24, 0
      %p45 = por %p43, %p44
      %p46 = scmp.ne.s32.totalorder %s32, %s33
      %p47 = scmp.eq.s32.totalorder %s25, 1
      %p48 = por %p46, %p47
      %p50 = scmp.ne.s32.totalorder %s33, %s49
      %p51 = scmp.eq.s32.totalorder %s25, 0
      %p52 = por %p50, %p51
      %s54 = sadd.s32 %s53, 1
      %p57 = scmp.eq.s32.totalorder %s19, 1
      %p58 = scmp.ne.s32.totalorder %s53, %s55
      %p59 = scmp.eq.s32.totalorder %s19, 0
      %p60 = por %p58, %p59
      %p61 = scmp.ne.s32.totalorder %s53, %s55
      %p62 = scmp.eq.s32.totalorder %s24, 1
      %p63 = por %p61, %p62
      %p64 = scmp.ne.s32.totalorder %s55, %s56
      %p65 = scmp.eq.s32.totalorder %s24, 0
      %p66 = por %p64, %p65
      %p67 = scmp.ne.s32.totalorder %s55, %s56
      %p68 = scmp.eq.s32.totalorder %s25, 1
      %p69 = por %p67, %p68
      %p71 = scmp.ne.s32.totalorder %s56, %s70
      %p72 = scmp.eq.s32.totalorder %s25, 0
      %p73 = por %p71, %p72
      %s75 = sadd.s32 %s74, 1
      %p78 = scmp.eq.s32.totalorder %s19, 1
      %p79 = scmp.ne.s32.totalorder %s74, %s76
      %p80 = scmp.eq.s32.totalorder %s19, 0
      %p81 = por %p79, %p80
      %p82 = scmp.ne.s32.totalorder %s74, %s76
      %p83 = scmp.eq.s32.totalorder %s24, 1
      %p84 = por %p82, %p83
      %p85 = scmp.ne.s32.totalorder %s76, %s77
      %p86 = scmp.eq.s32.totalorder %s24, 0
      %p87 = por %p85, %p86
      %p88 = scmp.ne.s32.totalorder %s76, %s77
      %p89 = scmp.eq.s32.totalorder %s25, 1
      %p90 = por %p88, %p89
      %p92 = scmp.ne.s32.totalorder %s77, %s91
      %p93 = scmp.eq.s32.totalorder %s25, 0
      %p94 = por %p92, %p93
      %s96 = sadd.s32 %s95, 1
      %p99 = scmp.eq.s32.totalorder %s19, 1
      %p100 = scmp.ne.s32.totalorder %s95, %s97
      %p101 = scmp.eq.s32.totalorder %s19, 0
      %p102 = por %p100, %p101
      %p103 = scmp.ne.s32.totalorder %s95, %s97
      %p104 = scmp.eq.s32.totalorder %s24, 1
      %p105 = por %p103, %p104
      %p106 = scmp.ne.s32.totalorder %s97, %s98
      %p107 = scmp.eq.s32.totalorder %s24, 0
      %p108 = por %p106, %p107
      %p109 = scmp.ne.s32.totalorder %s97, %s98
      %p110 = scmp.eq.s32.totalorder %s25, 1
      %p111 = por %p109, %p110
      %p113 = scmp.ne.s32.totalorder %s98, %s112
      %p114 = scmp.eq.s32.totalorder %s25, 0
      %p115 = por %p113, %p114
      %s117 = sadd.s32 %s116, 1
      %p120 = scmp.eq.s32.totalorder %s19, 1
      %p121 = scmp.ne.s32.totalorder %s116, %s118
      %p122 = scmp.eq.s32.totalorder %s19, 0
      %p123 = por %p121, %p122
      %p124 = scmp.ne.s32.totalorder %s116, %s118
      %p125 = scmp.eq.s32.totalorder %s24, 1
      %p126 = por %p124, %p125
      %p127 = scmp.ne.s32.totalorder %s118, %s119
      %p128 = scmp.eq.s32.totalorder %s24, 0
      %p129 = por %p127, %p128
      %p130 = scmp.ne.s32.totalorder %s118, %s119
      %p131 = scmp.eq.s32.totalorder %s25, 1
      %p132 = por %p130, %p131
      %p134 = scmp.ne.s32.totalorder %s119, %s133
      %p135 = scmp.eq.s32.totalorder %s25, 0
      %p136 = por %p134, %p135
      %s138 = sadd.s32 %s137, 1
      %p141 = scmp.eq.s32.totalorder %s19, 1
      %p142 = scmp.ne.s32.totalorder %s137, %s139
      %p143 = scmp.eq.s32.totalorder %s19, 0
      %p144 = por %p142, %p143
      %p145 = scmp.ne.s32.totalorder %s137, %s139
      %p146 = scmp.eq.s32.totalorder %s24, 1
      %p147 = por %p145, %p146
      %p148 = scmp.ne.s32.totalorder %s139, %s140
      %p149 = scmp.eq.s32.totalorder %s24, 0
      %p150 = por %p148, %p149
      %p151 = scmp.ne.s32.totalorder %s139, %s140
      %p152 = scmp.eq.s32.totalorder %s25, 1
      %p153 = por %p151, %p152
      %p155 = scmp.ne.s32.totalorder %s140, %s154
      %p156 = scmp.eq.s32.totalorder %s25, 0
      %p157 = por %p155, %p156
      %s158 = ssub.s32 %s19, %s26
      %p159 = scmp.eq.s32.totalorder %s158, 0
      %s161 = sadd.s32 %s160, 1
      %s162 = scalar_select %p159, %s160, %s161
      %p165 = pneg %p159
      %p166 = scmp.eq.s32.totalorder %s19, 1
      %p167 = por %p165, %p166
      %p168 = scmp.ne.s32.totalorder %s160, %s163
      %p169 = scmp.eq.s32.totalorder %s19, 0
      %p170 = por %p168, %p169
      %p171 = scmp.ne.s32.totalorder %s160, %s163
      %p172 = scmp.eq.s32.totalorder %s24, 1
      %p173 = por %p171, %p172
      %p174 = scmp.ne.s32.totalorder %s163, %s164
      %p175 = scmp.eq.s32.totalorder %s24, 0
      %p176 = por %p174, %p175
      %p177 = scmp.ne.s32.totalorder %s163, %s164
      %p178 = scmp.eq.s32.totalorder %s25, 1
      %p179 = por %p177, %p178
      %p181 = scmp.ne.s32.totalorder %s164, %s180
      %p182 = scmp.eq.s32.totalorder %s25, 0
      %p183 = por %p181, %p182
      %p184 = scmp.le.s32.totalorder 1, %s19
      %p185 = scmp.lt.s32.totalorder %s19, 3
      %p186 = pnand %p184, %p185
      %p187 = pneg %p186
      // Predicated region
      $region9: #{tpu_custom_call.1} parent=5 // pred_check
        _
      $region10: #{tpu_custom_call.1} parent=5 // pred_check_branch
        %189 = sbr.rel (%p186) target = $region12
      $region11: #{tpu_custom_call.1} parent=5 // pred_region
        %s190 = ssub.s32 %s19, 1
        // Predicated region
        $region13: #{tpu_custom_call.1} parent=11 // pred_check
          %p191 = pneg %p66
        $region14: #{tpu_custom_call.1} parent=11 // pred_check_branch
          %193 = sbr.rel (%p191) target = $region16
        $region15: #{tpu_custom_call.1} parent=11 // pred_region
          _
        $region16: #{tpu_custom_call.1} parent=11 // pred_fallthru
          _
        // Predicated region
        $region17: #{tpu_custom_call.1} parent=11 // pred_check
          %p194 = pneg %p87
        $region18: #{tpu_custom_call.1} parent=11 // pred_check_branch
          %196 = sbr.rel (%p194) target = $region20
        $region19: #{tpu_custom_call.1} parent=11 // pred_region
          _
        $region20: #{tpu_custom_call.1} parent=11 // pred_fallthru
          _
        // Predicated region
        $region21: #{tpu_custom_call.1} parent=11 // pred_check
          %p197 = pneg %p108
        $region22: #{tpu_custom_call.1} parent=11 // pred_check_branch
          %199 = sbr.rel (%p197) target = $region24
        $region23: #{tpu_custom_call.1} parent=11 // pred_region
          %201 = vsyncadd [#allocation9], 0
          %s203 = sshll.u32 %s3, 4
          %s204 = int_to_ptr.hbm [resolvable:$true] %s203
          %s205 = sshll.u32 [#allocation8], 4
          %s206 = int_to_ptr.vmem [resolvable:$true] %s205
          %208 = dma.hbm_to_vmem [thread:$0]  %s204, 128, %s206, [#allocation9]
        $region24: #{tpu_custom_call.1} parent=11 // pred_fallthru
          _
        // Predicated region
        $region25: #{tpu_custom_call.1} parent=11 // pred_check
          %p209 = pneg %p129
        $region26: #{tpu_custom_call.1} parent=11 // pred_check_branch
          %211 = sbr.rel (%p209) target = $region28
        $region27: #{tpu_custom_call.1} parent=11 // pred_region
          _
        $region28: #{tpu_custom_call.1} parent=11 // pred_fallthru
          _
        // Predicated region
        $region29: #{tpu_custom_call.1} parent=11 // pred_check
          %p212 = pneg %p150
        $region30: #{tpu_custom_call.1} parent=11 // pred_check_branch
          %214 = sbr.rel (%p212) target = $region32
        $region31: #{tpu_custom_call.1} parent=11 // pred_region
          %216 = vsyncadd [#allocation9], 0
          %s218 = sshll.u32 %s5, 4
          %s219 = int_to_ptr.hbm [resolvable:$true] %s218
          %s220 = sshll.u32 [#allocation10], 4
          %s221 = int_to_ptr.vmem [resolvable:$true] %s220
          %223 = dma.hbm_to_vmem [thread:$0]  %s219, 64, %s221, [#allocation9]
        $region32: #{tpu_custom_call.1} parent=11 // pred_fallthru
          _
      $region12: #{tpu_custom_call.1} parent=5 // pred_fallthru
        _
      %p224 = scmp.lt.s32.totalorder %s19, 2
      // Predicated region
      $region33: #{tpu_custom_call.1} parent=5 // pred_check
        %p225 = pneg %p224
      $region34: #{tpu_custom_call.1} parent=5 // pred_check_branch
        %227 = sbr.rel (%p225) target = $region36
      $region35: #{tpu_custom_call.1} parent=5 // pred_region
        // Predicated region
        $region37: #{tpu_custom_call.1} parent=35 // pred_check
          %p228 = pneg %p39
        $region38: #{tpu_custom_call.1} parent=35 // pred_check_branch
          %230 = sbr.rel (%p228) target = $region40
        $region39: #{tpu_custom_call.1} parent=35 // pred_region
          %s231 = sand.u32 %s29, 1
          %s232 = scalar_lea.sflag [#allocation6], %s231
          %s233 = sand.u32 %s29, 1
          %s234 = smul.addr %s233, 40
          %s235 = scalar_lea.vmem [#allocation5], %s234
          %237 = vsyncadd %s232, 0
          %s238 = smul.addr %s19, 5
          %s239 = smul.addr %s238, 8
          %s240 = scalar_lea.hbm %s0, %s239
          %s242 = sshll.u32 %s240, 4
          %s243 = int_to_ptr.hbm [resolvable:$true] %s242
          %s244 = sshll.u32 %s235, 4
          %s245 = int_to_ptr.vmem [resolvable:$true] %s244
          %247 = dma.hbm_to_vmem [thread:$0]  %s243, 640, %s245, %s232
        $region40: #{tpu_custom_call.1} parent=35 // pred_fallthru
          _
      $region36: #{tpu_custom_call.1} parent=5 // pred_fallthru
        _
      %p248 = scmp.le.s32.totalorder 1, %s19
      %p249 = scmp.lt.s32.totalorder %s19, 3
      %p250 = pnand %p248, %p249
      %p251 = pneg %p250
      // Predicated region
      $region41: #{tpu_custom_call.1} parent=5 // pred_check
        _
      $region42: #{tpu_custom_call.1} parent=5 // pred_check_branch
        %253 = sbr.rel (%p250) target = $region44
      $region43: #{tpu_custom_call.1} parent=5 // pred_region
        %s254 = ssub.s32 %s19, 1
        %s255 = sand.u32 %s32, 1
        %s256 = scalar_lea.sflag [#allocation6], %s255
        %s257 = sand.u32 %s32, 1
        %s258 = smul.addr %s257, 40
        %s259 = scalar_lea.vmem [#allocation5], %s258
        // Predicated region
        $region45: #{tpu_custom_call.1} parent=43 // pred_check
          %p260 = pneg %p45
        $region46: #{tpu_custom_call.1} parent=43 // pred_check_branch
          %262 = sbr.rel (%p260) target = $region48
        $region47: #{tpu_custom_call.1} parent=43 // pred_region
          %264 = dma.done %s256, 640
        $region48: #{tpu_custom_call.1} parent=43 // pred_fallthru
          _
        // Predicated region
        $region49: #{tpu_custom_call.1} parent=43 // pred_check
          %p265 = pneg %p108
        $region50: #{tpu_custom_call.1} parent=43 // pred_check_branch
          %267 = sbr.rel (%p265) target = $region52
        $region51: #{tpu_custom_call.1} parent=43 // pred_region
          %269 = dma.done [#allocation9], 128
        $region52: #{tpu_custom_call.1} parent=43 // pred_fallthru
          _
        // Predicated region
        $region53: #{tpu_custom_call.1} parent=43 // pred_check
          %p270 = pneg %p150
        $region54: #{tpu_custom_call.1} parent=43 // pred_check_branch
          %272 = sbr.rel (%p270) target = $region56
        $region55: #{tpu_custom_call.1} parent=43 // pred_region
          %274 = dma.done [#allocation9], 64
        $region56: #{tpu_custom_call.1} parent=43 // pred_fallthru
          _
        %s275 = sand.u32 %s32, 1
        %s276 = scalar_lea.sflag [#allocation6], %s275
        %s277 = sand.u32 %s32, 1
        %s278 = smul.addr %s277, 40
        %s279 = scalar_lea.vmem [#allocation5], %s278
        %p280 = pneg %p45
        %p281 = pneg %p42
        %p282 = pneg %p66
        %p283 = pneg %p63
        %p284 = pneg %p87
        %p285 = pneg %p84
        %p286 = pneg %p108
        %p287 = pneg %p105
        %p288 = pneg %p129
        %p289 = pneg %p126
        %p290 = pneg %p150
        %p291 = pneg %p147
        %p292 = pneg %p176
        %p293 = pneg %p173
        %s294 = sand.u32 %s163, 1
        %s295 = scalar_lea.sflag [#allocation7], %s294
        %s296 = sand.u32 %s163, 1
        %s297 = smul.addr %s296, 32
        %s298 = scalar_lea.vmem [#allocation11], %s297
        %p299 = scmp.eq.s32.totalorder %s24, 0
        // Predicated region
        $region57: #{tpu_custom_call.1} parent=43 // pred_check
          %p300 = pneg %p299
        $region58: #{tpu_custom_call.1} parent=43 // pred_check_branch
          %302 = sbr.rel (%p300) target = $region60
        $region59: #{tpu_custom_call.1} parent=43 // pred_region
          %303 = vst [vmem:[#allocation2] sm:$0xff] 0.0
          %304 = vst [vmem:[#allocation2 + $0x8] sm:$0xff] 0.0
          %305 = vst [vmem:[#allocation2 + $0x10] sm:$0xff] 0.0
          %306 = vst [vmem:[#allocation2 + $0x18] sm:$0xff] 0.0
          %307 = vst [vmem:[#allocation2 + $0x20] sm:$0xff] 0.0
        $region60: #{tpu_custom_call.1} parent=43 // pred_fallthru
          _
        %v308 = vld [vmem:[%s259] sm:$0xff]
        %v309 = vld [vmem:[%s259 + $0x8] sm:$0xff]
        %v310 = vld [vmem:[%s259 + $0x10] sm:$0xff]
        %v311 = vld [vmem:[%s259 + $0x18] sm:$0xff]
        %v312 = vld [vmem:[%s259 + $0x20] sm:$0xff]
        %317 = vrot.lane.b32.xlu0 %v308, 42
        %v318 = vpop.permute.xlu0 %317
        %319 = vrot.lane.b32.xlu0 %v309, 42
        %v320 = vpop.permute.xlu0 %319
        %321 = vrot.lane.b32.xlu0 %v310, 42
        %v322 = vpop.permute.xlu0 %321
        %323 = vrot.lane.b32.xlu0 %v311, 42
        %v324 = vpop.permute.xlu0 %323
        %vm325 = vcmask 343040
        %v326 = vsel %vm325, %v318, %v320
        %v327 = vsel %vm325, %v320, %v322
        %v328 = vsel %vm325, %v322, %v324
        %333 = vst [vmem:[#allocation3] sm:$0xff] %v326
        %334 = vst [vmem:[#allocation3 + $0x8] sm:$0xff] %v327
        %335 = vst [vmem:[#allocation3 + $0x10] sm:$0xff] %v328
        %vm336 = vcmask 130048
        %337 = vst.msk [vmem:[#allocation3 + $0x18] sm:$0xff] %vm336, %v324
        %338 = vrot.lane.b32.xlu0 %v308, 41
        %v339 = vpop.permute.xlu0 %338
        %340 = vrot.lane.b32.xlu0 %v309, 41
        %v341 = vpop.permute.xlu0 %340
        %342 = vrot.lane.b32.xlu0 %v310, 41
        %v343 = vpop.permute.xlu0 %342
        %344 = vrot.lane.b32.xlu0 %v311, 41
        %v345 = vpop.permute.xlu0 %344
        %vm346 = vcmask 334848
        %v347 = vsel %vm346, %v339, %v341
        %v348 = vsel %vm346, %v341, %v343
        %v349 = vsel %vm346, %v343, %v345
        %354 = vst [vmem:[#allocation3 + $0x20] sm:$0xff] %v347
        %355 = vst [vmem:[#allocation3 + $0x28] sm:$0xff] %v348
        %356 = vst [vmem:[#allocation3 + $0x30] sm:$0xff] %v349
        %357 = vst.msk [vmem:[#allocation3 + $0x38] sm:$0xff] %vm336, %v345
        %358 = vrot.lane.b32.xlu0 %v308, 40
        %v359 = vpop.permute.xlu0 %358
        %360 = vrot.lane.b32.xlu0 %v309, 40
        %v361 = vpop.permute.xlu0 %360
        %362 = vrot.lane.b32.xlu0 %v310, 40
        %v363 = vpop.permute.xlu0 %362
        %364 = vrot.lane.b32.xlu0 %v311, 40
        %v365 = vpop.permute.xlu0 %364
        %vm366 = vcmask 326656
        %v367 = vsel %vm366, %v359, %v361
        %v368 = vsel %vm366, %v361, %v363
        %v369 = vsel %vm366, %v363, %v365
        %374 = vst [vmem:[#allocation3 + $0x40] sm:$0xff] %v367
        %375 = vst [vmem:[#allocation3 + $0x48] sm:$0xff] %v368
        %376 = vst [vmem:[#allocation3 + $0x50] sm:$0xff] %v369
        %377 = vst.msk [vmem:[#allocation3 + $0x58] sm:$0xff] %vm336, %v365
        %378 = vrot.lane.b32.xlu0 %v308, 39
        %v379 = vpop.permute.xlu0 %378
        %380 = vrot.lane.b32.xlu0 %v309, 39
        %v381 = vpop.permute.xlu0 %380
        %382 = vrot.lane.b32.xlu0 %v310, 39
        %v383 = vpop.permute.xlu0 %382
        %384 = vrot.lane.b32.xlu0 %v311, 39
        %v385 = vpop.permute.xlu0 %384
        %vm386 = vcmask 318464
        %v387 = vsel %vm386, %v379, %v381
        %v388 = vsel %vm386, %v381, %v383
        %v389 = vsel %vm386, %v383, %v385
        %394 = vst [vmem:[#allocation3 + $0x60] sm:$0xff] %v387
        %395 = vst [vmem:[#allocation3 + $0x68] sm:$0xff] %v388
        %396 = vst [vmem:[#allocation3 + $0x70] sm:$0xff] %v389
        %397 = vst.msk [vmem:[#allocation3 + $0x78] sm:$0xff] %vm336, %v385
        %398 = vrot.lane.b32.xlu0 %v308, 38
        %v399 = vpop.permute.xlu0 %398
        %400 = vrot.lane.b32.xlu0 %v309, 38
        %v401 = vpop.permute.xlu0 %400
        %402 = vrot.lane.b32.xlu0 %v310, 38
        %v403 = vpop.permute.xlu0 %402
        %404 = vrot.lane.b32.xlu0 %v311, 38
        %v405 = vpop.permute.xlu0 %404
        %vm406 = vcmask 310272
        %v407 = vsel %vm406, %v399, %v401
        %v408 = vsel %vm406, %v401, %v403
        %v409 = vsel %vm406, %v403, %v405
        %414 = vst [vmem:[#allocation3 + $0x80] sm:$0xff] %v407
        %415 = vst [vmem:[#allocation3 + $0x88] sm:$0xff] %v408
        %416 = vst [vmem:[#allocation3 + $0x90] sm:$0xff] %v409
        %417 = vst.msk [vmem:[#allocation3 + $0x98] sm:$0xff] %vm336, %v405
        %418 = vrot.lane.b32.xlu0 %v308, 22
        %v419 = vpop.permute.xlu0 %418
        %420 = vrot.lane.b32.xlu0 %v309, 22
        %v421 = vpop.permute.xlu0 %420
        %422 = vrot.lane.b32.xlu0 %v310, 22
        %v423 = vpop.permute.xlu0 %422
        %424 = vrot.lane.b32.xlu0 %v311, 22
        %v425 = vpop.permute.xlu0 %424
        %vm426 = vcmask 179200
        %v427 = vsel %vm426, %v419, %v421
        %v428 = vsel %vm426, %v421, %v423
        %v429 = vsel %vm426, %v423, %v425
        %434 = vst [vmem:[#allocation3 + $0xa0] sm:$0xff] %v427
        %435 = vst [vmem:[#allocation3 + $0xa8] sm:$0xff] %v428
        %436 = vst [vmem:[#allocation3 + $0xb0] sm:$0xff] %v429
        %437 = vst.msk [vmem:[#allocation3 + $0xb8] sm:$0xff] %vm336, %v425
        %438 = vrot.lane.b32.xlu0 %v308, 21
        %v439 = vpop.permute.xlu0 %438
        %440 = vrot.lane.b32.xlu0 %v309, 21
        %v441 = vpop.permute.xlu0 %440
        %442 = vrot.lane.b32.xlu0 %v310, 21
        %v443 = vpop.permute.xlu0 %442
        %444 = vrot.lane.b32.xlu0 %v311, 21
        %v445 = vpop.permute.xlu0 %444
        %vm446 = vcmask 171008
        %v447 = vsel %vm446, %v439, %v441
        %v448 = vsel %vm446, %v441, %v443
        %v449 = vsel %vm446, %v443, %v445
        %454 = vst [vmem:[#allocation3 + $0xc0] sm:$0xff] %v447
        %455 = vst [vmem:[#allocation3 + $0xc8] sm:$0xff] %v448
        %456 = vst [vmem:[#allocation3 + $0xd0] sm:$0xff] %v449
        %457 = vst.msk [vmem:[#allocation3 + $0xd8] sm:$0xff] %vm336, %v445
        %458 = vrot.lane.b32.xlu0 %v308, 20
        %v459 = vpop.permute.xlu0 %458
        %460 = vrot.lane.b32.xlu0 %v309, 20
        %v461 = vpop.permute.xlu0 %460
        %462 = vrot.lane.b32.xlu0 %v310, 20
        %v463 = vpop.permute.xlu0 %462
        %464 = vrot.lane.b32.xlu0 %v311, 20
        %v465 = vpop.permute.xlu0 %464
        %vm466 = vcmask 162816
        %v467 = vsel %vm466, %v459, %v461
        %v468 = vsel %vm466, %v461, %v463
        %v469 = vsel %vm466, %v463, %v465
        %474 = vst [vmem:[#allocation3 + $0xe0] sm:$0xff] %v467
        %475 = vst [vmem:[#allocation3 + $0xe8] sm:$0xff] %v468
        %476 = vst [vmem:[#allocation3 + $0xf0] sm:$0xff] %v469
        %477 = vst.msk [vmem:[#allocation3 + $0xf8] sm:$0xff] %vm336, %v465
        %478 = vrot.lane.b32.xlu0 %v308, 19
        %v479 = vpop.permute.xlu0 %478
        %480 = vrot.lane.b32.xlu0 %v309, 19
        %v481 = vpop.permute.xlu0 %480
        %482 = vrot.lane.b32.xlu0 %v310, 19
        %v483 = vpop.permute.xlu0 %482
        %484 = vrot.lane.b32.xlu0 %v311, 19
        %v485 = vpop.permute.xlu0 %484
        %vm486 = vcmask 154624
        %v487 = vsel %vm486, %v479, %v481
        %v488 = vsel %vm486, %v481, %v483
        %v489 = vsel %vm486, %v483, %v485
        %494 = vst [vmem:[#allocation3 + $0x100] sm:$0xff] %v487
        %495 = vst [vmem:[#allocation3 + $0x108] sm:$0xff] %v488
        %496 = vst [vmem:[#allocation3 + $0x110] sm:$0xff] %v489
        %497 = vst.msk [vmem:[#allocation3 + $0x118] sm:$0xff] %vm336, %v485
        %498 = vrot.lane.b32.xlu0 %v308, 18
        %v499 = vpop.permute.xlu0 %498
        %500 = vrot.lane.b32.xlu0 %v309, 18
        %v501 = vpop.permute.xlu0 %500
        %502 = vrot.lane.b32.xlu0 %v310, 18
        %v503 = vpop.permute.xlu0 %502
        %504 = vrot.lane.b32.xlu0 %v311, 18
        %v505 = vpop.permute.xlu0 %504
        %vm506 = vcmask 146432
        %v507 = vsel %vm506, %v499, %v501
        %v508 = vsel %vm506, %v501, %v503
        %v509 = vsel %vm506, %v503, %v505
        %514 = vst [vmem:[#allocation3 + $0x120] sm:$0xff] %v507
        %515 = vst [vmem:[#allocation3 + $0x128] sm:$0xff] %v508
        %516 = vst [vmem:[#allocation3 + $0x130] sm:$0xff] %v509
        %517 = vst.msk [vmem:[#allocation3 + $0x138] sm:$0xff] %vm336, %v505
        %519 = vrot.lane.b32.xlu0 %v308, 2
        %v520 = vpop.permute.xlu0 %519
        %521 = vrot.lane.b32.xlu0 %v309, 2
        %v522 = vpop.permute.xlu0 %521
        %523 = vrot.lane.b32.xlu0 %v310, 2
        %v524 = vpop.permute.xlu0 %523
        %525 = vrot.lane.b32.xlu0 %v311, 2
        %v526 = vpop.permute.xlu0 %525
        %527 = vrot.lane.b32.xlu0 %v312, 2
        %v528 = vpop.permute.xlu0 %527
        %vm529 = vcmask 15360
        %v530 = vsel %vm529, %v520, %v522
        %v531 = vsel %vm529, %v522, %v524
        %v532 = vsel %vm529, %v524, %v526
        %v533 = vsel %vm529, %v526, %v528
        %538 = vst [vmem:[#allocation3 + $0x140] sm:$0xff] %v530
        %539 = vst [vmem:[#allocation3 + $0x148] sm:$0xff] %v531
        %540 = vst [vmem:[#allocation3 + $0x150] sm:$0xff] %v532
        %541 = vst.msk [vmem:[#allocation3 + $0x158] sm:$0xff] %vm336, %v533
        %542 = vrot.lane.b32.xlu0 %v308, 1
        %v543 = vpop.permute.xlu0 %542
        %544 = vrot.lane.b32.xlu0 %v309, 1
        %v545 = vpop.permute.xlu0 %544
        %546 = vrot.lane.b32.xlu0 %v310, 1
        %v547 = vpop.permute.xlu0 %546
        %548 = vrot.lane.b32.xlu0 %v311, 1
        %v549 = vpop.permute.xlu0 %548
        %550 = vrot.lane.b32.xlu0 %v312, 1
        %v551 = vpop.permute.xlu0 %550
        %vm552 = vcmask 7168
        %v553 = vsel %vm552, %v543, %v545
        %v554 = vsel %vm552, %v545, %v547
        %v555 = vsel %vm552, %v547, %v549
        %v556 = vsel %vm552, %v549, %v551
        %561 = vst [vmem:[#allocation3 + $0x160] sm:$0xff] %v553
        %562 = vst [vmem:[#allocation3 + $0x168] sm:$0xff] %v554
        %563 = vst [vmem:[#allocation3 + $0x170] sm:$0xff] %v555
        %564 = vst.msk [vmem:[#allocation3 + $0x178] sm:$0xff] %vm336, %v556
        %565 = vst [vmem:[#allocation3 + $0x180] sm:$0xff] %v309
        %566 = vst [vmem:[#allocation3 + $0x188] sm:$0xff] %v310
        %567 = vst [vmem:[#allocation3 + $0x190] sm:$0xff] %v311
        %568 = vst.msk [vmem:[#allocation3 + $0x198] sm:$0xff] %vm336, %v312
        %569 = vrot.lane.b32.xlu0 %v309, 127
        %v570 = vpop.permute.xlu0 %569
        %571 = vrot.lane.b32.xlu0 %v310, 127
        %v572 = vpop.permute.xlu0 %571
        %573 = vrot.lane.b32.xlu0 %v311, 127
        %v574 = vpop.permute.xlu0 %573
        %575 = vrot.lane.b32.xlu0 %v312, 127
        %v576 = vpop.permute.xlu0 %575
        %vm577 = vcmask 1039360
        %v578 = vsel %vm577, %v570, %v572
        %v579 = vsel %vm577, %v572, %v574
        %v580 = vsel %vm577, %v574, %v576
        %585 = vst [vmem:[#allocation3 + $0x1a0] sm:$0xff] %v578
        %586 = vst [vmem:[#allocation3 + $0x1a8] sm:$0xff] %v579
        %587 = vst [vmem:[#allocation3 + $0x1b0] sm:$0xff] %v580
        %588 = vst.msk [vmem:[#allocation3 + $0x1b8] sm:$0xff] %vm336, %v576
        %589 = vrot.lane.b32.xlu0 %v309, 126
        %v590 = vpop.permute.xlu0 %589
        %591 = vrot.lane.b32.xlu0 %v310, 126
        %v592 = vpop.permute.xlu0 %591
        %593 = vrot.lane.b32.xlu0 %v311, 126
        %v594 = vpop.permute.xlu0 %593
        %595 = vrot.lane.b32.xlu0 %v312, 126
        %v596 = vpop.permute.xlu0 %595
        %vm597 = vcmask 1031168
        %v598 = vsel %vm597, %v590, %v592
        %v599 = vsel %vm597, %v592, %v594
        %v600 = vsel %vm597, %v594, %v596
        %605 = vst [vmem:[#allocation3 + $0x1c0] sm:$0xff] %v598
        %606 = vst [vmem:[#allocation3 + $0x1c8] sm:$0xff] %v599
        %607 = vst [vmem:[#allocation3 + $0x1d0] sm:$0xff] %v600
        %608 = vst.msk [vmem:[#allocation3 + $0x1d8] sm:$0xff] %vm336, %v596
        %609 = vrot.lane.b32.xlu0 %v309, 110
        %v610 = vpop.permute.xlu0 %609
        %611 = vrot.lane.b32.xlu0 %v310, 110
        %v612 = vpop.permute.xlu0 %611
        %613 = vrot.lane.b32.xlu0 %v311, 110
        %v614 = vpop.permute.xlu0 %613
        %615 = vrot.lane.b32.xlu0 %v312, 110
        %v616 = vpop.permute.xlu0 %615
        %vm617 = vcmask 900096
        %v618 = vsel %vm617, %v610, %v612
        %v619 = vsel %vm617, %v612, %v614
        %v620 = vsel %vm617, %v614, %v616
        %625 = vst [vmem:[#allocation3 + $0x1e0] sm:$0xff] %v618
        %626 = vst [vmem:[#allocation3 + $0x1e8] sm:$0xff] %v619
        %627 = vst [vmem:[#allocation3 + $0x1f0] sm:$0xff] %v620
        %628 = vst.msk [vmem:[#allocation3 + $0x1f8] sm:$0xff] %vm336, %v616
        %629 = vrot.lane.b32.xlu0 %v309, 109
        %v630 = vpop.permute.xlu0 %629
        %631 = vrot.lane.b32.xlu0 %v310, 109
        %v632 = vpop.permute.xlu0 %631
        %633 = vrot.lane.b32.xlu0 %v311, 109
        %v634 = vpop.permute.xlu0 %633
        %635 = vrot.lane.b32.xlu0 %v312, 109
        %v636 = vpop.permute.xlu0 %635
        %vm637 = vcmask 891904
        %v638 = vsel %vm637, %v630, %v632
        %v639 = vsel %vm637, %v632, %v634
        %v640 = vsel %vm637, %v634, %v636
        %645 = vst [vmem:[#allocation3 + $0x200] sm:$0xff] %v638
        %646 = vst [vmem:[#allocation3 + $0x208] sm:$0xff] %v639
        %647 = vst [vmem:[#allocation3 + $0x210] sm:$0xff] %v640
        %648 = vst.msk [vmem:[#allocation3 + $0x218] sm:$0xff] %vm336, %v636
        %649 = vrot.lane.b32.xlu0 %v309, 108
        %v650 = vpop.permute.xlu0 %649
        %651 = vrot.lane.b32.xlu0 %v310, 108
        %v652 = vpop.permute.xlu0 %651
        %653 = vrot.lane.b32.xlu0 %v311, 108
        %v654 = vpop.permute.xlu0 %653
        %655 = vrot.lane.b32.xlu0 %v312, 108
        %v656 = vpop.permute.xlu0 %655
        %vm657 = vcmask 883712
        %v658 = vsel %vm657, %v650, %v652
        %v659 = vsel %vm657, %v652, %v654
        %v660 = vsel %vm657, %v654, %v656
        %665 = vst [vmem:[#allocation3 + $0x220] sm:$0xff] %v658
        %666 = vst [vmem:[#allocation3 + $0x228] sm:$0xff] %v659
        %667 = vst [vmem:[#allocation3 + $0x230] sm:$0xff] %v660
        %668 = vst.msk [vmem:[#allocation3 + $0x238] sm:$0xff] %vm336, %v656
        %669 = vrot.lane.b32.xlu0 %v309, 107
        %v670 = vpop.permute.xlu0 %669
        %671 = vrot.lane.b32.xlu0 %v310, 107
        %v672 = vpop.permute.xlu0 %671
        %673 = vrot.lane.b32.xlu0 %v311, 107
        %v674 = vpop.permute.xlu0 %673
        %675 = vrot.lane.b32.xlu0 %v312, 107
        %v676 = vpop.permute.xlu0 %675
        %vm677 = vcmask 875520
        %v678 = vsel %vm677, %v670, %v672
        %v679 = vsel %vm677, %v672, %v674
        %v680 = vsel %vm677, %v674, %v676
        %685 = vst [vmem:[#allocation3 + $0x240] sm:$0xff] %v678
        %686 = vst [vmem:[#allocation3 + $0x248] sm:$0xff] %v679
        %687 = vst [vmem:[#allocation3 + $0x250] sm:$0xff] %v680
        %688 = vst.msk [vmem:[#allocation3 + $0x258] sm:$0xff] %vm336, %v676
        %689 = vrot.lane.b32.xlu0 %v309, 106
        %v690 = vpop.permute.xlu0 %689
        %691 = vrot.lane.b32.xlu0 %v310, 106
        %v692 = vpop.permute.xlu0 %691
        %693 = vrot.lane.b32.xlu0 %v311, 106
        %v694 = vpop.permute.xlu0 %693
        %695 = vrot.lane.b32.xlu0 %v312, 106
        %v696 = vpop.permute.xlu0 %695
        %vm697 = vcmask 867328
        %v698 = vsel %vm697, %v690, %v692
        %v699 = vsel %vm697, %v692, %v694
        %v700 = vsel %vm697, %v694, %v696
        %705 = vst [vmem:[#allocation3 + $0x260] sm:$0xff] %v698
        %706 = vst [vmem:[#allocation3 + $0x268] sm:$0xff] %v699
        %707 = vst [vmem:[#allocation3 + $0x270] sm:$0xff] %v700
        %708 = vst.msk [vmem:[#allocation3 + $0x278] sm:$0xff] %vm336, %v696
        %709 = vrot.lane.b32.xlu0 %v309, 90
        %v710 = vpop.permute.xlu0 %709
        %711 = vrot.lane.b32.xlu0 %v310, 90
        %v712 = vpop.permute.xlu0 %711
        %713 = vrot.lane.b32.xlu0 %v311, 90
        %v714 = vpop.permute.xlu0 %713
        %715 = vrot.lane.b32.xlu0 %v312, 90
        %v716 = vpop.permute.xlu0 %715
        %vm717 = vcmask 736256
        %v718 = vsel %vm717, %v710, %v712
        %v719 = vsel %vm717, %v712, %v714
        %v720 = vsel %vm717, %v714, %v716
        %725 = vst [vmem:[#allocation3 + $0x280] sm:$0xff] %v718
        %726 = vst [vmem:[#allocation3 + $0x288] sm:$0xff] %v719
        %727 = vst [vmem:[#allocation3 + $0x290] sm:$0xff] %v720
        %728 = vst.msk [vmem:[#allocation3 + $0x298] sm:$0xff] %vm336, %v716
        %729 = vrot.lane.b32.xlu0 %v309, 89
        %v730 = vpop.permute.xlu0 %729
        %731 = vrot.lane.b32.xlu0 %v310, 89
        %v732 = vpop.permute.xlu0 %731
        %733 = vrot.lane.b32.xlu0 %v311, 89
        %v734 = vpop.permute.xlu0 %733
        %735 = vrot.lane.b32.xlu0 %v312, 89
        %v736 = vpop.permute.xlu0 %735
        %vm737 = vcmask 728064
        %v738 = vsel %vm737, %v730, %v732
        %v739 = vsel %vm737, %v732, %v734
        %v740 = vsel %vm737, %v734, %v736
        %745 = vst [vmem:[#allocation3 + $0x2a0] sm:$0xff] %v738
        %746 = vst [vmem:[#allocation3 + $0x2a8] sm:$0xff] %v739
        %747 = vst [vmem:[#allocation3 + $0x2b0] sm:$0xff] %v740
        %748 = vst.msk [vmem:[#allocation3 + $0x2b8] sm:$0xff] %vm336, %v736
        %749 = vrot.lane.b32.xlu0 %v309, 88
        %v750 = vpop.permute.xlu0 %749
        %751 = vrot.lane.b32.xlu0 %v310, 88
        %v752 = vpop.permute.xlu0 %751
        %753 = vrot.lane.b32.xlu0 %v311, 88
        %v754 = vpop.permute.xlu0 %753
        %755 = vrot.lane.b32.xlu0 %v312, 88
        %v756 = vpop.permute.xlu0 %755
        %vm757 = vcmask 719872
        %v758 = vsel %vm757, %v750, %v752
        %v759 = vsel %vm757, %v752, %v754
        %v760 = vsel %vm757, %v754, %v756
        %765 = vst [vmem:[#allocation3 + $0x2c0] sm:$0xff] %v758
        %766 = vst [vmem:[#allocation3 + $0x2c8] sm:$0xff] %v759
        %767 = vst [vmem:[#allocation3 + $0x2d0] sm:$0xff] %v760
        %768 = vst.msk [vmem:[#allocation3 + $0x2d8] sm:$0xff] %vm336, %v756
        %769 = vrot.lane.b32.xlu0 %v309, 87
        %v770 = vpop.permute.xlu0 %769
        %771 = vrot.lane.b32.xlu0 %v310, 87
        %v772 = vpop.permute.xlu0 %771
        %773 = vrot.lane.b32.xlu0 %v311, 87
        %v774 = vpop.permute.xlu0 %773
        %775 = vrot.lane.b32.xlu0 %v312, 87
        %v776 = vpop.permute.xlu0 %775
        %vm777 = vcmask 711680
        %v778 = vsel %vm777, %v770, %v772
        %v779 = vsel %vm777, %v772, %v774
        %v780 = vsel %vm777, %v774, %v776
        %785 = vst [vmem:[#allocation3 + $0x2e0] sm:$0xff] %v778
        %786 = vst [vmem:[#allocation3 + $0x2e8] sm:$0xff] %v779
        %787 = vst [vmem:[#allocation3 + $0x2f0] sm:$0xff] %v780
        %788 = vst.msk [vmem:[#allocation3 + $0x2f8] sm:$0xff] %vm336, %v776
        %789 = vrot.lane.b32.xlu0 %v309, 86
        %v790 = vpop.permute.xlu0 %789
        %791 = vrot.lane.b32.xlu0 %v310, 86
        %v792 = vpop.permute.xlu0 %791
        %793 = vrot.lane.b32.xlu0 %v311, 86
        %v794 = vpop.permute.xlu0 %793
        %795 = vrot.lane.b32.xlu0 %v312, 86
        %v796 = vpop.permute.xlu0 %795
        %vm797 = vcmask 703488
        %v798 = vsel %vm797, %v790, %v792
        %v799 = vsel %vm797, %v792, %v794
        %v800 = vsel %vm797, %v794, %v796
        %805 = vst [vmem:[#allocation3 + $0x300] sm:$0xff] %v798
        %806 = vst [vmem:[#allocation3 + $0x308] sm:$0xff] %v799
        %807 = vst [vmem:[#allocation3 + $0x310] sm:$0xff] %v800
        %808 = vst.msk [vmem:[#allocation3 + $0x318] sm:$0xff] %vm336, %v796
        %v809 = vld [vmem:[%s1] sm:$0xff]
        %v810 = vld [vmem:[%s1 + $0x8] sm:$0xff]
        %v811 = vld [vmem:[#allocation3] sm:$0xff]
        %v812 = vld [vmem:[#allocation3 + $0x8] sm:$0xff]
        %v813 = vld [vmem:[#allocation3 + $0x10] sm:$0xff]
        %v814 = vld [vmem:[#allocation3 + $0x18] sm:$0xff]
        %v815 = vld [vmem:[#allocation3 + $0x20] sm:$0xff]
        %v816 = vld [vmem:[#allocation3 + $0x28] sm:$0xff]
        %v817 = vld [vmem:[#allocation3 + $0x30] sm:$0xff]
        %v818 = vld [vmem:[#allocation3 + $0x38] sm:$0xff]
        %v819 = vld [vmem:[#allocation3 + $0x40] sm:$0xff]
        %v820 = vld [vmem:[#allocation3 + $0x48] sm:$0xff]
        %v821 = vld [vmem:[#allocation3 + $0x50] sm:$0xff]
        %v822 = vld [vmem:[#allocation3 + $0x58] sm:$0xff]
        %v823 = vld [vmem:[#allocation3 + $0x60] sm:$0xff]
        %v824 = vld [vmem:[#allocation3 + $0x68] sm:$0xff]
        %v825 = vld [vmem:[#allocation3 + $0x70] sm:$0xff]
        %v826 = vld [vmem:[#allocation3 + $0x78] sm:$0xff]
        %v827 = vld [vmem:[#allocation3 + $0x80] sm:$0xff]
        %v828 = vld [vmem:[#allocation3 + $0x88] sm:$0xff]
        %v829 = vld [vmem:[#allocation3 + $0x90] sm:$0xff]
        %v830 = vld [vmem:[#allocation3 + $0x98] sm:$0xff]
        %v831 = vld [vmem:[#allocation3 + $0xa0] sm:$0xff]
        %v832 = vld [vmem:[#allocation3 + $0xa8] sm:$0xff]
        %v833 = vld [vmem:[#allocation3 + $0xb0] sm:$0xff]
        %v834 = vld [vmem:[#allocation3 + $0xb8] sm:$0xff]
        %v835 = vld [vmem:[#allocation3 + $0xc0] sm:$0xff]
        %v836 = vld [vmem:[#allocation3 + $0xc8] sm:$0xff]
        %v837 = vld [vmem:[#allocation3 + $0xd0] sm:$0xff]
        %v838 = vld [vmem:[#allocation3 + $0xd8] sm:$0xff]
        %v839 = vld [vmem:[#allocation3 + $0xe0] sm:$0xff]
        %v840 = vld [vmem:[#allocation3 + $0xe8] sm:$0xff]
        %v841 = vld [vmem:[#allocation3 + $0xf0] sm:$0xff]
        %v842 = vld [vmem:[#allocation3 + $0xf8] sm:$0xff]
        %v843 = vld [vmem:[#allocation3 + $0x100] sm:$0xff]
        %v844 = vld [vmem:[#allocation3 + $0x108] sm:$0xff]
        %v845 = vld [vmem:[#allocation3 + $0x110] sm:$0xff]
        %v846 = vld [vmem:[#allocation3 + $0x118] sm:$0xff]
        %v847 = vld [vmem:[#allocation3 + $0x120] sm:$0xff]
        %v848 = vld [vmem:[#allocation3 + $0x128] sm:$0xff]
        %v849 = vld [vmem:[#allocation3 + $0x130] sm:$0xff]
        %v850 = vld [vmem:[#allocation3 + $0x138] sm:$0xff]
        %v851 = vld [vmem:[#allocation3 + $0x140] sm:$0xff]
        %v852 = vld [vmem:[#allocation3 + $0x148] sm:$0xff]
        %v853 = vld [vmem:[#allocation3 + $0x150] sm:$0xff]
        %v854 = vld [vmem:[#allocation3 + $0x158] sm:$0xff]
        %v855 = vld [vmem:[#allocation3 + $0x160] sm:$0xff]
        %v856 = vld [vmem:[#allocation3 + $0x168] sm:$0xff]
        %v857 = vld [vmem:[#allocation3 + $0x170] sm:$0xff]
        %v858 = vld [vmem:[#allocation3 + $0x178] sm:$0xff]
        %v859 = vld [vmem:[#allocation3 + $0x180] sm:$0xff]
        %v860 = vld [vmem:[#allocation3 + $0x188] sm:$0xff]
        %v861 = vld [vmem:[#allocation3 + $0x190] sm:$0xff]
        %v862 = vld [vmem:[#allocation3 + $0x198] sm:$0xff]
        %v863 = vld [vmem:[#allocation3 + $0x1a0] sm:$0xff]
        %v864 = vld [vmem:[#allocation3 + $0x1a8] sm:$0xff]
        %v865 = vld [vmem:[#allocation3 + $0x1b0] sm:$0xff]
        %v866 = vld [vmem:[#allocation3 + $0x1b8] sm:$0xff]
        %v867 = vld [vmem:[#allocation3 + $0x1c0] sm:$0xff]
        %v868 = vld [vmem:[#allocation3 + $0x1c8] sm:$0xff]
        %v869 = vld [vmem:[#allocation3 + $0x1d0] sm:$0xff]
        %v870 = vld [vmem:[#allocation3 + $0x1d8] sm:$0xff]
        %v871 = vld [vmem:[#allocation3 + $0x1e0] sm:$0xff]
        %v872 = vld [vmem:[#allocation3 + $0x1e8] sm:$0xff]
        %v873 = vld [vmem:[#allocation3 + $0x1f0] sm:$0xff]
        %v874 = vld [vmem:[#allocation3 + $0x1f8] sm:$0xff]
        %v875 = vld [vmem:[#allocation3 + $0x200] sm:$0xff]
        %v876 = vld [vmem:[#allocation3 + $0x208] sm:$0xff]
        %v877 = vld [vmem:[#allocation3 + $0x210] sm:$0xff]
        %v878 = vld [vmem:[#allocation3 + $0x218] sm:$0xff]
        %v879 = vld [vmem:[#allocation3 + $0x220] sm:$0xff]
        %v880 = vld [vmem:[#allocation3 + $0x228] sm:$0xff]
        %v881 = vld [vmem:[#allocation3 + $0x230] sm:$0xff]
        %v882 = vld [vmem:[#allocation3 + $0x238] sm:$0xff]
        %v883 = vld [vmem:[#allocation3 + $0x240] sm:$0xff]
        %v884 = vld [vmem:[#allocation3 + $0x248] sm:$0xff]
        %v885 = vld [vmem:[#allocation3 + $0x250] sm:$0xff]
        %v886 = vld [vmem:[#allocation3 + $0x258] sm:$0xff]
        %v887 = vld [vmem:[#allocation3 + $0x260] sm:$0xff]
        %v888 = vld [vmem:[#allocation3 + $0x268] sm:$0xff]
        %v889 = vld [vmem:[#allocation3 + $0x270] sm:$0xff]
        %v890 = vld [vmem:[#allocation3 + $0x278] sm:$0xff]
        %v891 = vld [vmem:[#allocation3 + $0x280] sm:$0xff]
        %v892 = vld [vmem:[#allocation3 + $0x288] sm:$0xff]
        %v893 = vld [vmem:[#allocation3 + $0x290] sm:$0xff]
        %v894 = vld [vmem:[#allocation3 + $0x298] sm:$0xff]
        %v895 = vld [vmem:[#allocation3 + $0x2a0] sm:$0xff]
        %v896 = vld [vmem:[#allocation3 + $0x2a8] sm:$0xff]
        %v897 = vld [vmem:[#allocation3 + $0x2b0] sm:$0xff]
        %v898 = vld [vmem:[#allocation3 + $0x2b8] sm:$0xff]
        %v899 = vld [vmem:[#allocation3 + $0x2c0] sm:$0xff]
        %v900 = vld [vmem:[#allocation3 + $0x2c8] sm:$0xff]
        %v901 = vld [vmem:[#allocation3 + $0x2d0] sm:$0xff]
        %v902 = vld [vmem:[#allocation3 + $0x2d8] sm:$0xff]
        %v903 = vld [vmem:[#allocation3 + $0x2e0] sm:$0xff]
        %v904 = vld [vmem:[#allocation3 + $0x2e8] sm:$0xff]
        %v905 = vld [vmem:[#allocation3 + $0x2f0] sm:$0xff]
        %v906 = vld [vmem:[#allocation3 + $0x2f8] sm:$0xff]
        %v907 = vld [vmem:[#allocation3 + $0x300] sm:$0xff]
        %v908 = vld [vmem:[#allocation3 + $0x308] sm:$0xff]
        %v909 = vld [vmem:[#allocation3 + $0x310] sm:$0xff]
        %v910 = vld [vmem:[#allocation3 + $0x318] sm:$0xff]
        %v911 = vld [vmem:[%s2] sm:$0xff]
        %913 = vset.pattern.permute.xlu0 0
        %914 = vperm.xlu0 %913, %v911
        %v915 = vpop.permute.xlu0 %914
        %vm917 = vcmask 588800
        %v919 = vsel %vm917, %v810, 0
        %921 = vmatpush.msra.mxu0 %v871
        %922 = vmatpush.msra.mxu0 %v867
        %923 = vmatpush.msra.mxu0 %v863
        %924 = vmatpush.msra.mxu0 %v859
        %925 = vmatpush.msra.mxu0 %v855
        %926 = vmatpush.msra.mxu0 %v851
        %927 = vmatpush.msra.mxu0 %v847
        %928 = vmatpush.msra.mxu0 %v843
        %929 = vmatpush.msra.mxu0 %v839
        %930 = vmatpush.msra.mxu0 %v835
        %931 = vmatpush.msra.mxu0 %v831
        %932 = vmatpush.msra.mxu0 %v827
        %933 = vmatpush.msra.mxu0 %v823
        %934 = vmatpush.msra.mxu0 %v819
        %935 = vmatpush.msra.mxu0 %v815
        %936 = vmatpush.msra.mxu0 %v811
        %937 = vmatmul.f32.gmra.mxu0 %v809
        %v938 = vpop.f32.mrf.mxu0
        %v939 = vadd.f32 %v915, %v938
        %940 = vdwg.mxu0
        %941 = vmatpush.msra.mxu0 0.0
        %942 = vmatpush.msra.mxu0 0.0
        %943 = vmatpush.msra.mxu0 0.0
        %944 = vmatpush.msra.mxu0 0.0
        %945 = vmatpush.msra.mxu0 0.0
        %946 = vmatpush.msra.mxu0 0.0
        %947 = vmatpush.msra.mxu0 0.0
        %948 = vmatpush.msra.mxu0 %v907
        %949 = vmatpush.msra.mxu0 %v903
        %950 = vmatpush.msra.mxu0 %v899
        %951 = vmatpush.msra.mxu0 %v895
        %952 = vmatpush.msra.mxu0 %v891
        %953 = vmatpush.msra.mxu0 %v887
        %954 = vmatpush.msra.mxu0 %v883
        %955 = vmatpush.msra.mxu0 %v879
        %956 = vmatpush.msra.mxu0 %v875
        %957 = vmatmul.f32.gmra.mxu0 %v919
        %v958 = vpop.f32.mrf.mxu0
        %v959 = vadd.f32 %v939, %v958
        %960 = vdwg.mxu0
        %961 = vmatpush.msra.mxu0 %v872
        %962 = vmatpush.msra.mxu0 %v868
        %963 = vmatpush.msra.mxu0 %v864
        %964 = vmatpush.msra.mxu0 %v860
        %965 = vmatpush.msra.mxu0 %v856
        %966 = vmatpush.msra.mxu0 %v852
        %967 = vmatpush.msra.mxu0 %v848
        %968 = vmatpush.msra.mxu0 %v844
        %969 = vmatpush.msra.mxu0 %v840
        %970 = vmatpush.msra.mxu0 %v836
        %971 = vmatpush.msra.mxu0 %v832
        %972 = vmatpush.msra.mxu0 %v828
        %973 = vmatpush.msra.mxu0 %v824
        %974 = vmatpush.msra.mxu0 %v820
        %975 = vmatpush.msra.mxu0 %v816
        %976 = vmatpush.msra.mxu0 %v812
        %977 = vmatmul.f32.gmra.mxu0 %v809
        %v978 = vpop.f32.mrf.mxu0
        %v979 = vadd.f32 %v915, %v978
        %980 = vdwg.mxu0
        %981 = vmatpush.msra.mxu0 0.0
        %982 = vmatpush.msra.mxu0 0.0
        %983 = vmatpush.msra.mxu0 0.0
        %984 = vmatpush.msra.mxu0 0.0
        %985 = vmatpush.msra.mxu0 0.0
        %986 = vmatpush.msra.mxu0 0.0
        %987 = vmatpush.msra.mxu0 0.0
        %988 = vmatpush.msra.mxu0 %v908
        %989 = vmatpush.msra.mxu0 %v904
        %990 = vmatpush.msra.mxu0 %v900
        %991 = vmatpush.msra.mxu0 %v896
        %992 = vmatpush.msra.mxu0 %v892
        %993 = vmatpush.msra.mxu0 %v888
        %994 = vmatpush.msra.mxu0 %v884
        %995 = vmatpush.msra.mxu0 %v880
        %996 = vmatpush.msra.mxu0 %v876
        %997 = vmatmul.f32.gmra.mxu0 %v919
        %v998 = vpop.f32.mrf.mxu0
        %v999 = vadd.f32 %v979, %v998
        %1000 = vdwg.mxu0
        %1001 = vmatpush.msra.mxu0 %v873
        %1002 = vmatpush.msra.mxu0 %v869
        %1003 = vmatpush.msra.mxu0 %v865
        %1004 = vmatpush.msra.mxu0 %v861
        %1005 = vmatpush.msra.mxu0 %v857
        %1006 = vmatpush.msra.mxu0 %v853
        %1007 = vmatpush.msra.mxu0 %v849
        %1008 = vmatpush.msra.mxu0 %v845
        %1009 = vmatpush.msra.mxu0 %v841
        %1010 = vmatpush.msra.mxu0 %v837
        %1011 = vmatpush.msra.mxu0 %v833
        %1012 = vmatpush.msra.mxu0 %v829
        %1013 = vmatpush.msra.mxu0 %v825
        %1014 = vmatpush.msra.mxu0 %v821
        %1015 = vmatpush.msra.mxu0 %v817
        %1016 = vmatpush.msra.mxu0 %v813
        %1017 = vmatmul.f32.gmra.mxu0 %v809
        %v1018 = vpop.f32.mrf.mxu0
        %v1019 = vadd.f32 %v915, %v1018
        %1020 = vdwg.mxu0
        %1021 = vmatpush.msra.mxu0 0.0
        %1022 = vmatpush.msra.mxu0 0.0
        %1023 = vmatpush.msra.mxu0 0.0
        %1024 = vmatpush.msra.mxu0 0.0
        %1025 = vmatpush.msra.mxu0 0.0
        %1026 = vmatpush.msra.mxu0 0.0
        %1027 = vmatpush.msra.mxu0 0.0
        %1028 = vmatpush.msra.mxu0 %v909
        %1029 = vmatpush.msra.mxu0 %v905
        %1030 = vmatpush.msra.mxu0 %v901
        %1031 = vmatpush.msra.mxu0 %v897
        %1032 = vmatpush.msra.mxu0 %v893
        %1033 = vmatpush.msra.mxu0 %v889
        %1034 = vmatpush.msra.mxu0 %v885
        %1035 = vmatpush.msra.mxu0 %v881
        %1036 = vmatpush.msra.mxu0 %v877
        %1037 = vmatmul.f32.gmra.mxu0 %v919
        %v1038 = vpop.f32.mrf.mxu0
        %v1039 = vadd.f32 %v1019, %v1038
        %1040 = vdwg.mxu0
        %1041 = vmatpush.msra.mxu0 %v874
        %1042 = vmatpush.msra.mxu0 %v870
        %1043 = vmatpush.msra.mxu0 %v866
        %1044 = vmatpush.msra.mxu0 %v862
        %1045 = vmatpush.msra.mxu0 %v858
        %1046 = vmatpush.msra.mxu0 %v854
        %1047 = vmatpush.msra.mxu0 %v850
        %1048 = vmatpush.msra.mxu0 %v846
        %1049 = vmatpush.msra.mxu0 %v842
        %1050 = vmatpush.msra.mxu0 %v838
        %1051 = vmatpush.msra.mxu0 %v834
        %1052 = vmatpush.msra.mxu0 %v830
        %1053 = vmatpush.msra.mxu0 %v826
        %1054 = vmatpush.msra.mxu0 %v822
        %1055 = vmatpush.msra.mxu0 %v818
        %1056 = vmatpush.msra.mxu0 %v814
        %1057 = vmatmul.f32.gmra.mxu0 %v809
        %v1058 = vpop.f32.mrf.mxu0
        %v1059 = vadd.f32 %v915, %v1058
        %1060 = vdwg.mxu0
        %1061 = vmatpush.msra.mxu0 0.0
        %1062 = vmatpush.msra.mxu0 0.0
        %1063 = vmatpush.msra.mxu0 0.0
        %1064 = vmatpush.msra.mxu0 0.0
        %1065 = vmatpush.msra.mxu0 0.0
        %1066 = vmatpush.msra.mxu0 0.0
        %1067 = vmatpush.msra.mxu0 0.0
        %1068 = vmatpush.msra.mxu0 %v910
        %1069 = vmatpush.msra.mxu0 %v906
        %1070 = vmatpush.msra.mxu0 %v902
        %1071 = vmatpush.msra.mxu0 %v898
        %1072 = vmatpush.msra.mxu0 %v894
        %1073 = vmatpush.msra.mxu0 %v890
        %1074 = vmatpush.msra.mxu0 %v886
        %1075 = vmatpush.msra.mxu0 %v882
        %1076 = vmatpush.msra.mxu0 %v878
        %1077 = vmatmul.f32.gmra.mxu0 %v919
        %v1078 = vpop.f32.mrf.mxu0
        %v1079 = vadd.f32 %v1059, %v1078
        %1080 = vdwg.mxu0
        %v1081 = vld [vmem:[#allocation10] sm:$0xf]
        %v1083 = vperm.slane %v1081, 0
        %v1084 = vperm.slane %v1081, 1
        %v1085 = vperm.slane %v1081, 2
        %v1086 = vperm.slane %v1081, 3
        %v1091 = vmul.f32 %v959, %v1083
        %v1092 = vmul.f32 %v999, %v1084
        %v1093 = vmul.f32 %v1039, %v1085
        %v1094 = vmul.f32 %v1079, %v1086
        %1095 = vst [vmem:[#allocation2 + $0x8] sm:$0xff] %v1091
        %1096 = vst [vmem:[#allocation2 + $0x10] sm:$0xff] %v1092
        %1097 = vst [vmem:[#allocation2 + $0x18] sm:$0xff] %v1093
        %1098 = vst.msk [vmem:[#allocation2 + $0x20] sm:$0xff] %vm336, %v1094
        %v1099 = vld [vmem:[#allocation2] sm:$0xff]
        %v1100 = vld [vmem:[#allocation2 + $0x8] sm:$0xff]
        %v1101 = vld [vmem:[#allocation2 + $0x10] sm:$0xff]
        %v1102 = vld [vmem:[#allocation2 + $0x18] sm:$0xff]
        %v1103 = vld [vmem:[#allocation2 + $0x20] sm:$0xff]
        %1108 = vrot.lane.b32.xlu0 %v1099, 21
        %v1109 = vpop.permute.xlu0 %1108
        %1110 = vrot.lane.b32.xlu0 %v1100, 21
        %v1111 = vpop.permute.xlu0 %1110
        %1112 = vrot.lane.b32.xlu0 %v1101, 21
        %v1113 = vpop.permute.xlu0 %1112
        %1114 = vrot.lane.b32.xlu0 %v1102, 21
        %v1115 = vpop.permute.xlu0 %1114
        %v1116 = vsel %vm446, %v1109, %v1111
        %v1117 = vsel %vm446, %v1111, %v1113
        %v1118 = vsel %vm446, %v1113, %v1115
        %1123 = vst [vmem:[#allocation4] sm:$0xff] %v1116
        %1124 = vst [vmem:[#allocation4 + $0x8] sm:$0xff] %v1117
        %1125 = vst [vmem:[#allocation4 + $0x10] sm:$0xff] %v1118
        %1126 = vst.msk [vmem:[#allocation4 + $0x18] sm:$0xff] %vm336, %v1115
        %1127 = vrot.lane.b32.xlu0 %v1099, 20
        %v1128 = vpop.permute.xlu0 %1127
        %1129 = vrot.lane.b32.xlu0 %v1100, 20
        %v1130 = vpop.permute.xlu0 %1129
        %1131 = vrot.lane.b32.xlu0 %v1101, 20
        %v1132 = vpop.permute.xlu0 %1131
        %1133 = vrot.lane.b32.xlu0 %v1102, 20
        %v1134 = vpop.permute.xlu0 %1133
        %v1135 = vsel %vm466, %v1128, %v1130
        %v1136 = vsel %vm466, %v1130, %v1132
        %v1137 = vsel %vm466, %v1132, %v1134
        %1142 = vst [vmem:[#allocation4 + $0x20] sm:$0xff] %v1135
        %1143 = vst [vmem:[#allocation4 + $0x28] sm:$0xff] %v1136
        %1144 = vst [vmem:[#allocation4 + $0x30] sm:$0xff] %v1137
        %1145 = vst.msk [vmem:[#allocation4 + $0x38] sm:$0xff] %vm336, %v1134
        %1146 = vrot.lane.b32.xlu0 %v1099, 19
        %v1147 = vpop.permute.xlu0 %1146
        %1148 = vrot.lane.b32.xlu0 %v1100, 19
        %v1149 = vpop.permute.xlu0 %1148
        %1150 = vrot.lane.b32.xlu0 %v1101, 19
        %v1151 = vpop.permute.xlu0 %1150
        %1152 = vrot.lane.b32.xlu0 %v1102, 19
        %v1153 = vpop.permute.xlu0 %1152
        %v1154 = vsel %vm486, %v1147, %v1149
        %v1155 = vsel %vm486, %v1149, %v1151
        %v1156 = vsel %vm486, %v1151, %v1153
        %1161 = vst [vmem:[#allocation4 + $0x40] sm:$0xff] %v1154
        %1162 = vst [vmem:[#allocation4 + $0x48] sm:$0xff] %v1155
        %1163 = vst [vmem:[#allocation4 + $0x50] sm:$0xff] %v1156
        %1164 = vst.msk [vmem:[#allocation4 + $0x58] sm:$0xff] %vm336, %v1153
        %1166 = vrot.lane.b32.xlu0 %v1099, 1
        %v1167 = vpop.permute.xlu0 %1166
        %1168 = vrot.lane.b32.xlu0 %v1100, 1
        %v1169 = vpop.permute.xlu0 %1168
        %1170 = vrot.lane.b32.xlu0 %v1101, 1
        %v1171 = vpop.permute.xlu0 %1170
        %1172 = vrot.lane.b32.xlu0 %v1102, 1
        %v1173 = vpop.permute.xlu0 %1172
        %1174 = vrot.lane.b32.xlu0 %v1103, 1
        %v1175 = vpop.permute.xlu0 %1174
        %v1176 = vsel %vm552, %v1167, %v1169
        %v1177 = vsel %vm552, %v1169, %v1171
        %v1178 = vsel %vm552, %v1171, %v1173
        %v1179 = vsel %vm552, %v1173, %v1175
        %1184 = vst [vmem:[#allocation4 + $0x60] sm:$0xff] %v1176
        %1185 = vst [vmem:[#allocation4 + $0x68] sm:$0xff] %v1177
        %1186 = vst [vmem:[#allocation4 + $0x70] sm:$0xff] %v1178
        %1187 = vst.msk [vmem:[#allocation4 + $0x78] sm:$0xff] %vm336, %v1179
        %1188 = vst [vmem:[#allocation4 + $0x80] sm:$0xff] %v1100
        %1189 = vst [vmem:[#allocation4 + $0x88] sm:$0xff] %v1101
        %1190 = vst [vmem:[#allocation4 + $0x90] sm:$0xff] %v1102
        %1191 = vst.msk [vmem:[#allocation4 + $0x98] sm:$0xff] %vm336, %v1103
        %1192 = vrot.lane.b32.xlu0 %v1100, 127
        %v1193 = vpop.permute.xlu0 %1192
        %1194 = vrot.lane.b32.xlu0 %v1101, 127
        %v1195 = vpop.permute.xlu0 %1194
        %1196 = vrot.lane.b32.xlu0 %v1102, 127
        %v1197 = vpop.permute.xlu0 %1196
        %1198 = vrot.lane.b32.xlu0 %v1103, 127
        %v1199 = vpop.permute.xlu0 %1198
        %v1200 = vsel %vm577, %v1193, %v1195
        %v1201 = vsel %vm577, %v1195, %v1197
        %v1202 = vsel %vm577, %v1197, %v1199
        %1207 = vst [vmem:[#allocation4 + $0xa0] sm:$0xff] %v1200
        %1208 = vst [vmem:[#allocation4 + $0xa8] sm:$0xff] %v1201
        %1209 = vst [vmem:[#allocation4 + $0xb0] sm:$0xff] %v1202
        %1210 = vst.msk [vmem:[#allocation4 + $0xb8] sm:$0xff] %vm336, %v1199
        %1211 = vrot.lane.b32.xlu0 %v1100, 109
        %v1212 = vpop.permute.xlu0 %1211
        %1213 = vrot.lane.b32.xlu0 %v1101, 109
        %v1214 = vpop.permute.xlu0 %1213
        %1215 = vrot.lane.b32.xlu0 %v1102, 109
        %v1216 = vpop.permute.xlu0 %1215
        %1217 = vrot.lane.b32.xlu0 %v1103, 109
        %v1218 = vpop.permute.xlu0 %1217
        %v1219 = vsel %vm637, %v1212, %v1214
        %v1220 = vsel %vm637, %v1214, %v1216
        %v1221 = vsel %vm637, %v1216, %v1218
        %1226 = vst [vmem:[#allocation4 + $0xc0] sm:$0xff] %v1219
        %1227 = vst [vmem:[#allocation4 + $0xc8] sm:$0xff] %v1220
        %1228 = vst [vmem:[#allocation4 + $0xd0] sm:$0xff] %v1221
        %1229 = vst.msk [vmem:[#allocation4 + $0xd8] sm:$0xff] %vm336, %v1218
        %1230 = vrot.lane.b32.xlu0 %v1100, 108
        %v1231 = vpop.permute.xlu0 %1230
        %1232 = vrot.lane.b32.xlu0 %v1101, 108
        %v1233 = vpop.permute.xlu0 %1232
        %1234 = vrot.lane.b32.xlu0 %v1102, 108
        %v1235 = vpop.permute.xlu0 %1234
        %1236 = vrot.lane.b32.xlu0 %v1103, 108
        %v1237 = vpop.permute.xlu0 %1236
        %v1238 = vsel %vm657, %v1231, %v1233
        %v1239 = vsel %vm657, %v1233, %v1235
        %v1240 = vsel %vm657, %v1235, %v1237
        %1245 = vst [vmem:[#allocation4 + $0xe0] sm:$0xff] %v1238
        %1246 = vst [vmem:[#allocation4 + $0xe8] sm:$0xff] %v1239
        %1247 = vst [vmem:[#allocation4 + $0xf0] sm:$0xff] %v1240
        %1248 = vst.msk [vmem:[#allocation4 + $0xf8] sm:$0xff] %vm336, %v1237
        %1249 = vrot.lane.b32.xlu0 %v1100, 107
        %v1250 = vpop.permute.xlu0 %1249
        %1251 = vrot.lane.b32.xlu0 %v1101, 107
        %v1252 = vpop.permute.xlu0 %1251
        %1253 = vrot.lane.b32.xlu0 %v1102, 107
        %v1254 = vpop.permute.xlu0 %1253
        %1255 = vrot.lane.b32.xlu0 %v1103, 107
        %v1256 = vpop.permute.xlu0 %1255
        %v1257 = vsel %vm677, %v1250, %v1252
        %v1258 = vsel %vm677, %v1252, %v1254
        %v1259 = vsel %vm677, %v1254, %v1256
        %1264 = vst [vmem:[#allocation4 + $0x100] sm:$0xff] %v1257
        %1265 = vst [vmem:[#allocation4 + $0x108] sm:$0xff] %v1258
        %1266 = vst [vmem:[#allocation4 + $0x110] sm:$0xff] %v1259
        %1267 = vst.msk [vmem:[#allocation4 + $0x118] sm:$0xff] %vm336, %v1256
        %v1268 = vld [vmem:[#allocation8] sm:$0xff]
        %v1269 = vld [vmem:[#allocation4] sm:$0xff]
        %v1270 = vld [vmem:[#allocation4 + $0x8] sm:$0xff]
        %v1271 = vld [vmem:[#allocation4 + $0x10] sm:$0xff]
        %v1272 = vld [vmem:[#allocation4 + $0x18] sm:$0xff]
        %v1273 = vld [vmem:[#allocation4 + $0x20] sm:$0xff]
        %v1274 = vld [vmem:[#allocation4 + $0x28] sm:$0xff]
        %v1275 = vld [vmem:[#allocation4 + $0x30] sm:$0xff]
        %v1276 = vld [vmem:[#allocation4 + $0x38] sm:$0xff]
        %v1277 = vld [vmem:[#allocation4 + $0x40] sm:$0xff]
        %v1278 = vld [vmem:[#allocation4 + $0x48] sm:$0xff]
        %v1279 = vld [vmem:[#allocation4 + $0x50] sm:$0xff]
        %v1280 = vld [vmem:[#allocation4 + $0x58] sm:$0xff]
        %v1281 = vld [vmem:[#allocation4 + $0x60] sm:$0xff]
        %v1282 = vld [vmem:[#allocation4 + $0x68] sm:$0xff]
        %v1283 = vld [vmem:[#allocation4 + $0x70] sm:$0xff]
        %v1284 = vld [vmem:[#allocation4 + $0x78] sm:$0xff]
        %v1285 = vld [vmem:[#allocation4 + $0x80] sm:$0xff]
        %v1286 = vld [vmem:[#allocation4 + $0x88] sm:$0xff]
        %v1287 = vld [vmem:[#allocation4 + $0x90] sm:$0xff]
        %v1288 = vld [vmem:[#allocation4 + $0x98] sm:$0xff]
        %v1289 = vld [vmem:[#allocation4 + $0xa0] sm:$0xff]
        %v1290 = vld [vmem:[#allocation4 + $0xa8] sm:$0xff]
        %v1291 = vld [vmem:[#allocation4 + $0xb0] sm:$0xff]
        %v1292 = vld [vmem:[#allocation4 + $0xb8] sm:$0xff]
        %v1293 = vld [vmem:[#allocation4 + $0xc0] sm:$0xff]
        %v1294 = vld [vmem:[#allocation4 + $0xc8] sm:$0xff]
        %v1295 = vld [vmem:[#allocation4 + $0xd0] sm:$0xff]
        %v1296 = vld [vmem:[#allocation4 + $0xd8] sm:$0xff]
        %v1297 = vld [vmem:[#allocation4 + $0xe0] sm:$0xff]
        %v1298 = vld [vmem:[#allocation4 + $0xe8] sm:$0xff]
        %v1299 = vld [vmem:[#allocation4 + $0xf0] sm:$0xff]
        %v1300 = vld [vmem:[#allocation4 + $0xf8] sm:$0xff]
        %v1301 = vld [vmem:[#allocation4 + $0x100] sm:$0xff]
        %v1302 = vld [vmem:[#allocation4 + $0x108] sm:$0xff]
        %v1303 = vld [vmem:[#allocation4 + $0x110] sm:$0xff]
        %v1304 = vld [vmem:[#allocation4 + $0x118] sm:$0xff]
        %v1305 = vld [vmem:[%s4] sm:$0xff]
        %1307 = vset.pattern.permute.xlu0 0
        %1308 = vperm.xlu0 %1307, %v1305
        %v1309 = vpop.permute.xlu0 %1308
        %v1312 = vsel %vm917, %v1268, 0
        %1314 = vmatpush.msra.mxu0 0.0
        %1315 = vmatpush.msra.mxu0 0.0
        %1316 = vmatpush.msra.mxu0 0.0
        %1317 = vmatpush.msra.mxu0 0.0
        %1318 = vmatpush.msra.mxu0 0.0
        %1319 = vmatpush.msra.mxu0 0.0
        %1320 = vmatpush.msra.mxu0 0.0
        %1321 = vmatpush.msra.mxu0 %v1301
        %1322 = vmatpush.msra.mxu0 %v1297
        %1323 = vmatpush.msra.mxu0 %v1293
        %1324 = vmatpush.msra.mxu0 %v1289
        %1325 = vmatpush.msra.mxu0 %v1285
        %1326 = vmatpush.msra.mxu0 %v1281
        %1327 = vmatpush.msra.mxu0 %v1277
        %1328 = vmatpush.msra.mxu0 %v1273
        %1329 = vmatpush.msra.mxu0 %v1269
        %1330 = vmatmul.f32.gmra.mxu0 %v1312
        %v1331 = vpop.f32.mrf.mxu0
        %v1332 = vadd.f32 %v1309, %v1331
        %1333 = vdwg.mxu0
        %1334 = vmatpush.msra.mxu0 0.0
        %1335 = vmatpush.msra.mxu0 0.0
        %1336 = vmatpush.msra.mxu0 0.0
        %1337 = vmatpush.msra.mxu0 0.0
        %1338 = vmatpush.msra.mxu0 0.0
        %1339 = vmatpush.msra.mxu0 0.0
        %1340 = vmatpush.msra.mxu0 0.0
        %1341 = vmatpush.msra.mxu0 %v1302
        %1342 = vmatpush.msra.mxu0 %v1298
        %1343 = vmatpush.msra.mxu0 %v1294
        %1344 = vmatpush.msra.mxu0 %v1290
        %1345 = vmatpush.msra.mxu0 %v1286
        %1346 = vmatpush.msra.mxu0 %v1282
        %1347 = vmatpush.msra.mxu0 %v1278
        %1348 = vmatpush.msra.mxu0 %v1274
        %1349 = vmatpush.msra.mxu0 %v1270
        %1350 = vmatmul.f32.gmra.mxu0 %v1312
        %v1351 = vpop.f32.mrf.mxu0
        %v1352 = vadd.f32 %v1309, %v1351
        %1353 = vdwg.mxu0
        %1354 = vmatpush.msra.mxu0 0.0
        %1355 = vmatpush.msra.mxu0 0.0
        %1356 = vmatpush.msra.mxu0 0.0
        %1357 = vmatpush.msra.mxu0 0.0
        %1358 = vmatpush.msra.mxu0 0.0
        %1359 = vmatpush.msra.mxu0 0.0
        %1360 = vmatpush.msra.mxu0 0.0
        %1361 = vmatpush.msra.mxu0 %v1303
        %1362 = vmatpush.msra.mxu0 %v1299
        %1363 = vmatpush.msra.mxu0 %v1295
        %1364 = vmatpush.msra.mxu0 %v1291
        %1365 = vmatpush.msra.mxu0 %v1287
        %1366 = vmatpush.msra.mxu0 %v1283
        %1367 = vmatpush.msra.mxu0 %v1279
        %1368 = vmatpush.msra.mxu0 %v1275
        %1369 = vmatpush.msra.mxu0 %v1271
        %1370 = vmatmul.f32.gmra.mxu0 %v1312
        %v1371 = vpop.f32.mrf.mxu0
        %v1372 = vadd.f32 %v1309, %v1371
        %1373 = vdwg.mxu0
        %1374 = vmatpush.msra.mxu0 0.0
        %1375 = vmatpush.msra.mxu0 0.0
        %1376 = vmatpush.msra.mxu0 0.0
        %1377 = vmatpush.msra.mxu0 0.0
        %1378 = vmatpush.msra.mxu0 0.0
        %1379 = vmatpush.msra.mxu0 0.0
        %1380 = vmatpush.msra.mxu0 0.0
        %1381 = vmatpush.msra.mxu0 %v1304
        %1382 = vmatpush.msra.mxu0 %v1300
        %1383 = vmatpush.msra.mxu0 %v1296
        %1384 = vmatpush.msra.mxu0 %v1292
        %1385 = vmatpush.msra.mxu0 %v1288
        %1386 = vmatpush.msra.mxu0 %v1284
        %1387 = vmatpush.msra.mxu0 %v1280
        %1388 = vmatpush.msra.mxu0 %v1276
        %1389 = vmatpush.msra.mxu0 %v1272
        %1390 = vmatmul.f32.gmra.mxu0 %v1312
        %v1391 = vpop.f32.mrf.mxu0
        %v1392 = vadd.f32 %v1309, %v1391
        %1393 = vdwg.mxu0
        %1394 = vst [vmem:[%s298] sm:$0xff] %v1332
        %1395 = vst [vmem:[%s298 + $0x8] sm:$0xff] %v1352
        %1396 = vst [vmem:[%s298 + $0x10] sm:$0xff] %v1372
        %1397 = vst.msk [vmem:[%s298 + $0x18] sm:$0xff] %vm336, %v1392
        %s1398 = sand.u32 %s163, 1
        %s1399 = scalar_lea.sflag [#allocation7], %s1398
        %s1400 = sand.u32 %s163, 1
        %s1401 = smul.addr %s1400, 32
        %s1402 = scalar_lea.vmem [#allocation11], %s1401
        // Predicated region
        $region61: #{tpu_custom_call.1} parent=43 // pred_check
          %p1403 = pneg %p173
        $region62: #{tpu_custom_call.1} parent=43 // pred_check_branch
          %1405 = sbr.rel (%p1403) target = $region64
        $region63: #{tpu_custom_call.1} parent=43 // pred_region
          %1407 = vsyncadd %s1399, 0
          %s1408 = smul.addr %s24, 4
          %s1409 = smul.addr %s1408, 8
          %s1410 = scalar_lea.hbm %s6, %s1409
          %s1412 = sshll.u32 %s1402, 4
          %s1413 = int_to_ptr.vmem [resolvable:$true] %s1412
          %s1414 = sshll.u32 %s1410, 4
          %s1415 = int_to_ptr.hbm [resolvable:$true] %s1414
          %1417 = dma.vmem_to_hbm [thread:$0]  %s1413, 512, %s1415, %s1399
        $region64: #{tpu_custom_call.1} parent=43 // pred_fallthru
          _
      $region44: #{tpu_custom_call.1} parent=5 // pred_fallthru
        _
      %p1418 = scmp.le.s32.totalorder 2, %s19
      // Predicated region
      $region65: #{tpu_custom_call.1} parent=5 // pred_check
        %p1419 = pneg %p1418
      $region66: #{tpu_custom_call.1} parent=5 // pred_check_branch
        %1421 = sbr.rel (%p1419) target = $region68
      $region67: #{tpu_custom_call.1} parent=5 // pred_region
        %s1422 = ssub.s32 %s19, 2
        // Predicated region
        $region69: #{tpu_custom_call.1} parent=67 // pred_check
          %p1423 = pneg %p179
        $region70: #{tpu_custom_call.1} parent=67 // pred_check_branch
          %1425 = sbr.rel (%p1423) target = $region72
        $region71: #{tpu_custom_call.1} parent=67 // pred_region
          %s1426 = sand.u32 %s164, 1
          %s1427 = scalar_lea.sflag [#allocation7], %s1426
          %s1428 = sand.u32 %s164, 1
          %s1429 = smul.addr %s1428, 32
          %s1430 = scalar_lea.vmem [#allocation11], %s1429
          %1432 = dma.done %s1427, 512
        $region72: #{tpu_custom_call.1} parent=67 // pred_fallthru
          _
      $region68: #{tpu_custom_call.1} parent=5 // pred_fallthru
        _
    $region6: #{tpu_custom_call.1} parent=1 // loop_footer
      %s23 = sadd.s32 1, %s19
    $region7: #{tpu_custom_call.1} parent=1 // loop_footer_branch
      %18 = sbr.rel target = $region3
    $region8: #{tpu_custom_call.1} parent=1 // loop_exit
      _
    %1433 = vsyncpa [#allocation6], 1
    %s1434 = scalar_lea.sflag [#allocation6], 1
    %1435 = vsyncpa %s1434, 1
    %1436 = vsyncpa [#allocation9], 1
    %1437 = vsyncpa [#allocation7], 1
    %s1438 = scalar_lea.sflag [#allocation7], 1
    %1439 = vsyncpa %s1438, 1

</llo_original>
